<compile_context>
chip_gen: v5e
topology: v5e:2x2
jax: 0.10.0
libtpu: 0.0.40
codegen_flags: <defaults>
</compile_context>

<pallas_src>
import functools

import numpy as np
import jax
import jax.numpy as jnp
from jax.experimental import pallas as pl
from jax.experimental.pallas import tpu as pltpu

EPS = 1e-8


def _make_kernel(C_in, H, T, K, DIL, PAD, Bb):
    inv_n = 1.0 / float(H * T)

    def kernel(x_ref, alpha_ref, w1_ref, wrs_ref, brs_ref, p_ref, res_ref, skip_ref):
        a1 = alpha_ref[0]                    # PReLU slopes: scalar reads from SMEM
        a2 = alpha_ref[1]

        w1 = w1_ref[...]                     # (H, C_in)  bf16
        wrs = wrs_ref[...]                   # (2C, H)    bf16
        brs = brs_ref[...]                   # (2C, 1)    f32
        p = p_ref[...]                       # (H, 6+K)   f32 packed per-channel params
        b1, g1, be1 = p[:, 0:1], p[:, 1:2], p[:, 2:3]
        bd, g2, be2 = p[:, 3:4], p[:, 4:5], p[:, 5:6]
        wd = p[:, 6:6 + K]                   # (H, K) depthwise weights

        # (1, T) boundary masks for the K dilated taps -- loop-invariant, built once.
        t_idx = jax.lax.broadcasted_iota(jnp.int32, (1, T), 1)
        tap_masks = []
        for k in range(K):
            s = k * DIL - PAD
            if s > 0:
                tap_masks.append((t_idx < T - s).astype(jnp.float32))
            elif s < 0:
                tap_masks.append((t_idx >= -s).astype(jnp.float32))
            else:
                tap_masks.append(None)

        def groupnorm(v, gain, beta):
            # One-pass stats with a single fused lane-reduce over [v ; v*v], affine folded.
            st = jnp.sum(jnp.concatenate([v, v * v], axis=0), axis=1, keepdims=True)  # (2H, 1)
            s1 = jnp.sum(st[:H])
            s2 = jnp.sum(st[H:])
            mean = s1 * inv_n
            var = jnp.maximum(s2 * inv_n - mean * mean, 0.0)
            inv_std = jax.lax.rsqrt(var + EPS)
            scale = gain * inv_std                       # (H, 1)
            shift = beta - mean * scale                  # (H, 1)
            return v * scale + shift

        # Static unroll over the Bb samples of this block: independent pipelines ->
        # cross-sample ILP hides the GroupNorm scalar-reduction latency and MXU weight loads.
        for b in range(Bb):
            # ---- 1x1 conv: (H, C_in) x (C_in, T) on the MXU (bf16 operands, f32 acc) ----
            x = x_ref[b].astype(jnp.bfloat16)            # (C_in, T)
            h = jnp.dot(w1, x, preferred_element_type=jnp.float32) + b1

            # ---- PReLU 1 + GroupNorm(1, H) ----
            h = jnp.where(h >= 0, h, a1 * h)
            h = groupnorm(h, g1, be1)

            # ---- depthwise dilated conv: K taps via XLU lane rolls + (1, T) mask vmuls ----
            # out[t] = sum_k wd[:,k] * h[t + k*DIL - PAD], zero outside [0, T).
            acc = None
            for k in range(K):                           # K is small & static
                s = k * DIL - PAD
                tap = h if s == 0 else pltpu.roll(h, (-s) % T, axis=1)  # tap[t] = h[(t+s)%T]
                if tap_masks[k] is not None:
                    tap = tap * tap_masks[k]
                term = wd[:, k:k + 1] * tap
                acc = term if acc is None else acc + term
            acc = acc + bd

            # ---- PReLU 2 + GroupNorm 2 ----
            acc = jnp.where(acc >= 0, acc, a2 * acc)
            acc = groupnorm(acc, g2, be2)

            # ---- fused residual + skip 1x1 convs: one (2*C_in, H) x (H, T) MXU matmul ----
            out = jnp.dot(wrs, acc.astype(jnp.bfloat16),
                          preferred_element_type=jnp.float32) + brs
            res_ref[b] = out[:C_in].astype(res_ref.dtype)
            skip_ref[b] = out[C_in:].astype(skip_ref.dtype)

    return kernel


def _pick_samples_per_step(B, C_in, H, T, *, min_steps=2, vmem_budget_bytes=24 << 20):
    """Largest divisor of B that keeps >= min_steps grid steps and fits the VMEM budget.

    min_steps=2 keeps both v7x TensorCores busy (v5e/v6e are single-TC and could take the
    whole batch in one step; the one extra ~0.5us step is negligible there).  The budget
    leaves headroom under v7x's 32 MiB scoped VMEM; for very large T also raise
    vmem_limit_bytes in CompilerParams.
    """
    # Rough per-sample per-step bytes: double-buffered x + res + skip tiles plus
    # ~6 live (H, T) f32 intermediates (h, taps, acc, stacked stats).
    per_sample = 4 * (2 * C_in * T + 2 * 2 * C_in * T + 6 * H * T)
    cap = max(1, int(vmem_budget_bytes) // max(per_sample, 1))
    target = max(1, min(cap, -(-B // max(min_steps, 1))))   # ceil(B / min_steps), VMEM-capped
    bb = 1
    for d in range(1, min(target, B) + 1):
        if B % d == 0:
            bb = d
    return bb


def depth_conv1d_pallas(x, params, *, kernel_size, dilation, padding,
                        out_dtype=jnp.float32, samples_per_step=None):
    B, C_in, T = x.shape
    H = params["w1"].shape[0]
    K = kernel_size
    T_out = T + 2 * padding - dilation * (K - 1)
    assert T_out == T, ("kernel implements the 'same-length' non-causal config "
                        "(2*padding == dilation*(kernel-1)), as used in the TCN stack")
    assert T % 128 == 0, "keep T a multiple of 128 so stores stay lane-dense (unmasked vst)"

    Bb = samples_per_step if samples_per_step is not None else _pick_samples_per_step(B, C_in, H, T)
    assert B % Bb == 0, "samples_per_step must divide the batch"
    n_steps = B // Bb

    # One-time wrapper-side parameter plumbing (tiny arrays; layout + precision only).
    w1 = params["w1"].astype(jnp.bfloat16)                                             # (H, C_in)
    wrs = jnp.concatenate([params["wr"], params["ws"]], axis=0).astype(jnp.bfloat16)   # (2C, H)
    brs = jnp.concatenate([params["br"], params["bs"]], axis=0).astype(jnp.float32)    # (2C, 1)
    # Pack the 6 per-channel (H,1) params + the (H,K) depthwise weights into one VMEM ref.
    packed = jnp.concatenate(
        [params["b1"], params["g1"], params["be1"],
         params["bd"], params["g2"], params["be2"],
         params["wd"].astype(jnp.float32)], axis=1).astype(jnp.float32)                # (H, 6+K)
    alphas = jnp.concatenate([params["a1"].reshape(-1),
                              params["a2"].reshape(-1)]).astype(jnp.float32)           # (2,) SMEM

    kern = _make_kernel(C_in, H, T, K, dilation, padding, Bb)

    def _const_spec(arr):
        nd = arr.ndim
        return pl.BlockSpec(arr.shape, lambda i, _nd=nd: (0,) * _nd)

    vmem_params = [w1, wrs, brs, packed]

    in_specs = ([pl.BlockSpec((Bb, C_in, T), lambda i: (i, 0, 0))]             # Bb samples / step
                + [pl.BlockSpec(memory_space=pltpu.MemorySpace.SMEM)]          # PReLU slopes
                + [_const_spec(p) for p in vmem_params])
    out_specs = [pl.BlockSpec((Bb, C_in, T), lambda i: (i, 0, 0)),
                 pl.BlockSpec((Bb, C_in, T), lambda i: (i, 0, 0))]
    out_shape = (jax.ShapeDtypeStruct((B, C_in, T), out_dtype),
                 jax.ShapeDtypeStruct((B, C_in, T), out_dtype))

    fn = pl.pallas_call(
        kern,
        out_shape=out_shape,
        grid_spec=pltpu.PrefetchScalarGridSpec(
            num_scalar_prefetch=0,
            grid=(n_steps,),
            in_specs=in_specs,
            out_specs=out_specs,
        ),
        compiler_params=pltpu.CompilerParams(dimension_semantics=("parallel",)),
    )
    return fn(x, alphas, *vmem_params)


def depth_conv1d_ref(x, params, *, kernel_size, dilation, padding, mxu_bf16=False):
    """Pure-JAX reference of the PyTorch forward (non-causal, skip=True).

    mxu_bf16=True mirrors the kernel's mixed-precision policy (bf16 matmul operands,
    f32 accumulation & elementwise math); False is the pure-f32 module semantics.
    """
    cast = (lambda a: a.astype(jnp.bfloat16)) if mxu_bf16 else (lambda a: a)
    w1, b1, a1, g1, be1 = (params[k] for k in ["w1", "b1", "a1", "g1", "be1"])
    wd, bd, a2, g2, be2 = (params[k] for k in ["wd", "bd", "a2", "g2", "be2"])
    wr, br, ws, bs = (params[k] for k in ["wr", "br", "ws", "bs"])
    B, C_in, T = x.shape
    H = w1.shape[0]
    T_out = T + 2 * padding - dilation * (kernel_size - 1)

    h = jnp.einsum("hc,bct->bht", cast(w1), cast(x),
                   preferred_element_type=jnp.float32) + b1[None]
    h = jnp.where(h >= 0, h, a1 * h)
    m = h.mean(axis=(1, 2), keepdims=True)
    v = ((h - m) ** 2).mean(axis=(1, 2), keepdims=True)
    h = (h - m) / jnp.sqrt(v + EPS) * g1[None] + be1[None]

    hp = jnp.pad(h, ((0, 0), (0, 0), (padding, padding)))
    acc = jnp.zeros((B, H, T_out), jnp.float32)
    for k in range(kernel_size):
        acc = acc + wd[None, :, k:k + 1] * hp[:, :, k * dilation:k * dilation + T_out]
    acc = acc + bd[None]
    acc = jnp.where(acc >= 0, acc, a2 * acc)
    m2 = acc.mean(axis=(1, 2), keepdims=True)
    v2 = ((acc - m2) ** 2).mean(axis=(1, 2), keepdims=True)
    acc = (acc - m2) / jnp.sqrt(v2 + EPS) * g2[None] + be2[None]

    res = jnp.einsum("ch,bht->bct", cast(wr), cast(acc),
                     preferred_element_type=jnp.float32) + br[None]
    skp = jnp.einsum("ch,bht->bct", cast(ws), cast(acc),
                     preferred_element_type=jnp.float32) + bs[None]
    return res, skp


def init_params(key, input_channel, hidden_channel, kernel_size):
    ks = jax.random.split(key, 12)
    f32 = jnp.float32
    H, C = hidden_channel, input_channel
    return {
        # conv1d: Conv1d(C_in, H, 1) -> weight (H, C_in), bias (H, 1)
        "w1": 0.1 * jax.random.normal(ks[0], (H, C), f32),
        "b1": 0.1 * jax.random.normal(ks[1], (H, 1), f32),
        # PReLU() default single shared slope
        "a1": jnp.full((1,), 0.25, f32),
        # GroupNorm(1, H) affine (randomized a little so the affine path is exercised)
        "g1": 1.0 + 0.1 * jax.random.normal(ks[2], (H, 1), f32),
        "be1": 0.1 * jax.random.normal(ks[3], (H, 1), f32),
        # dconv1d: Conv1d(H, H, K, groups=H) -> weight (H, 1, K) stored as (H, K)
        "wd": 0.1 * jax.random.normal(ks[4], (H, kernel_size), f32),
        "bd": 0.1 * jax.random.normal(ks[5], (H, 1), f32),
        "a2": jnp.full((1,), 0.25, f32),
        "g2": 1.0 + 0.1 * jax.random.normal(ks[6], (H, 1), f32),
        "be2": 0.1 * jax.random.normal(ks[7], (H, 1), f32),
        # res_out / skip_out: Conv1d(H, C_in, 1)
        "wr": 0.1 * jax.random.normal(ks[8], (C, H), f32),
        "br": 0.1 * jax.random.normal(ks[9], (C, 1), f32),
        "ws": 0.1 * jax.random.normal(ks[10], (C, H), f32),
        "bs": 0.1 * jax.random.normal(ks[11], (C, 1), f32),
    }


if __name__ == "__main__":
    # DepthConv1d(input_channel=16, hidden_channel=32, kernel=3, padding=2, dilation=2)
    # B=4 so the batching shows: Bb=2 samples per step, 2 grid steps ("parallel" on v7x).
    B, C_IN, HID, T = 4, 16, 32, 256
    KERNEL, DILATION = 3, 2
    PADDING = DILATION * (KERNEL - 1) // 2     # 2 -> same-length, non-causal output

    key = jax.random.PRNGKey(0)
    kx, kp = jax.random.split(key)
    x = jax.random.normal(kx, (B, C_IN, T), jnp.float32)
    params = init_params(kp, C_IN, HID, KERNEL)

    run = functools.partial(depth_conv1d_pallas,
                            kernel_size=KERNEL, dilation=DILATION, padding=PADDING)
    residual, skip = jax.block_until_ready(run(x, params))

    # Tight check vs a reference mirroring the kernel's bf16-MXU / f32-elementwise policy.
    res_mp, skip_mp = depth_conv1d_ref(x, params, kernel_size=KERNEL, dilation=DILATION,
                                       padding=PADDING, mxu_bf16=True)
    assert np.allclose(np.asarray(residual), np.asarray(res_mp), atol=1e-3, rtol=1e-3)
    assert np.allclose(np.asarray(skip), np.asarray(skip_mp), atol=1e-3, rtol=1e-3)

    # Loose check vs the pure-f32 module semantics (bf16 MXU operands cost ~1e-2 abs).
    res_f32, skip_f32 = depth_conv1d_ref(x, params, kernel_size=KERNEL, dilation=DILATION,
                                         padding=PADDING, mxu_bf16=False)
    assert np.allclose(np.asarray(residual), np.asarray(res_f32), atol=5e-2, rtol=5e-2)
    assert np.allclose(np.asarray(skip), np.asarray(skip_f32), atol=5e-2, rtol=5e-2)

    print("KERNEL_OK")
</pallas_src>

<mosaic_0001>
module attributes {stable_mosaic.version = 11 : i64} {
  func.func @kernel(%arg0: i32, %arg1: memref<2x16x256xf32, #tpu.memory_space<vmem>>, %arg2: memref<2xf32, #tpu.memory_space<smem>>, %arg3: memref<32x16xbf16, #tpu.memory_space<vmem>>, %arg4: memref<32x32xbf16, #tpu.memory_space<vmem>>, %arg5: memref<32x1xf32, #tpu.memory_space<vmem>>, %arg6: memref<32x9xf32, #tpu.memory_space<vmem>>, %arg7: memref<2x16x256xf32, #tpu.memory_space<vmem>>, %arg8: memref<2x16x256xf32, #tpu.memory_space<vmem>>) attributes {dimension_semantics = [#tpu.dimension_semantics<parallel>], iteration_bounds = array<i64: 2>, scalar_prefetch = 0 : i64, scratch_operands = 0 : i64, tpu.core_type = #tpu.core_type<tc>, window_params = [{transform_indices = @transform_0, window_bounds = array<i64: 2, 16, 256>}, {transform_indices = @transform_1, window_bounds = array<i64: 2>}, {pipeline_mode = #tpu.pipeline_mode<synchronous>, transform_indices = @transform_2, window_bounds = array<i64: 32, 16>}, {pipeline_mode = #tpu.pipeline_mode<synchronous>, transform_indices = @transform_3, window_bounds = array<i64: 32, 32>}, {pipeline_mode = #tpu.pipeline_mode<synchronous>, transform_indices = @transform_4, window_bounds = array<i64: 32, 1>}, {pipeline_mode = #tpu.pipeline_mode<synchronous>, transform_indices = @transform_5, window_bounds = array<i64: 32, 9>}, {transform_indices = @transform_6, window_bounds = array<i64: 2, 16, 256>}, {transform_indices = @transform_7, window_bounds = array<i64: 2, 16, 256>}]} {
    %c0 = arith.constant 0 : index
    %0 = memref.load %arg2[%c0] : memref<2xf32, #tpu.memory_space<smem>>
    %c1 = arith.constant 1 : index
    %1 = memref.load %arg2[%c1] : memref<2xf32, #tpu.memory_space<smem>>
    %c0_0 = arith.constant 0 : index
    %c0_1 = arith.constant 0 : index
    %2 = vector.load %arg3[%c0_0, %c0_1] : memref<32x16xbf16, #tpu.memory_space<vmem>>, vector<32x16xbf16>
    %c0_2 = arith.constant 0 : index
    %c0_3 = arith.constant 0 : index
    %3 = vector.load %arg4[%c0_2, %c0_3] : memref<32x32xbf16, #tpu.memory_space<vmem>>, vector<32x32xbf16>
    %c0_4 = arith.constant 0 : index
    %c0_5 = arith.constant 0 : index
    %4 = vector.load %arg5[%c0_4, %c0_5] : memref<32x1xf32, #tpu.memory_space<vmem>>, vector<32x1xf32>
    %c0_6 = arith.constant 0 : index
    %c0_7 = arith.constant 0 : index
    %5 = vector.load %arg6[%c0_6, %c0_7] : memref<32x9xf32, #tpu.memory_space<vmem>>, vector<32x9xf32>
    %6 = vector.extract_strided_slice %5 {offsets = [0, 0], sizes = [32, 1], strides = [1, 1]} : vector<32x9xf32> to vector<32x1xf32>
    %7 = vector.extract_strided_slice %5 {offsets = [0, 1], sizes = [32, 1], strides = [1, 1]} : vector<32x9xf32> to vector<32x1xf32>
    %8 = vector.extract_strided_slice %5 {offsets = [0, 2], sizes = [32, 1], strides = [1, 1]} : vector<32x9xf32> to vector<32x1xf32>
    %9 = vector.extract_strided_slice %5 {offsets = [0, 3], sizes = [32, 1], strides = [1, 1]} : vector<32x9xf32> to vector<32x1xf32>
    %10 = vector.extract_strided_slice %5 {offsets = [0, 4], sizes = [32, 1], strides = [1, 1]} : vector<32x9xf32> to vector<32x1xf32>
    %11 = vector.extract_strided_slice %5 {offsets = [0, 5], sizes = [32, 1], strides = [1, 1]} : vector<32x9xf32> to vector<32x1xf32>
    %12 = vector.extract_strided_slice %5 {offsets = [0, 6], sizes = [32, 3], strides = [1, 1]} : vector<32x9xf32> to vector<32x3xf32>
    %13 = tpu.iota {dimensions = array<i32: 1>} : vector<1x256xi32>
    %c2_i32 = arith.constant 2 : i32
    %14 = vector.broadcast %c2_i32 : i32 to vector<1x256xi32>
    %15 = arith.cmpi sge, %13, %14 : vector<1x256xi32>
    %16 = arith.extui %15 : vector<1x256xi1> to vector<1x256xi32>
    %17 = arith.sitofp %16 : vector<1x256xi32> to vector<1x256xf32>
    %c254_i32 = arith.constant 254 : i32
    %18 = vector.broadcast %c254_i32 : i32 to vector<1x256xi32>
    %19 = arith.cmpi slt, %13, %18 : vector<1x256xi32>
    %20 = arith.extui %19 : vector<1x256xi1> to vector<1x256xi32>
    %21 = arith.sitofp %20 : vector<1x256xi32> to vector<1x256xf32>
    %c0_8 = arith.constant 0 : index
    %c0_9 = arith.constant 0 : index
    %c0_10 = arith.constant 0 : index
    %22 = vector.load %arg1[%c0_8, %c0_9, %c0_10] : memref<2x16x256xf32, #tpu.memory_space<vmem>>, vector<1x16x256xf32>
    %23 = vector.shape_cast %22 : vector<1x16x256xf32> to vector<16x256xf32>
    %24 = arith.truncf %23 : vector<16x256xf32> to vector<16x256xbf16>
    %cst = arith.constant dense<0.000000e+00> : vector<32x256xf32>
    %25 = tpu.matmul %2, %24, %cst {dimension_numbers = #tpu.dot_dimension_numbers<[1], [0], [0], [1], [0, 0, 1, 1], [], []>} : vector<32x16xbf16>, vector<16x256xbf16>, vector<32x256xf32> -> vector<32x256xf32>
    %26 = vector.broadcast %6 : vector<32x1xf32> to vector<32x256xf32>
    %27 = arith.addf %25, %26 : vector<32x256xf32>
    %cst_11 = arith.constant 0.000000e+00 : f32
    %28 = vector.broadcast %cst_11 : f32 to vector<32x256xf32>
    %29 = arith.cmpf oge, %27, %28 : vector<32x256xf32>
    %30 = vector.broadcast %0 : f32 to vector<32x256xf32>
    %31 = arith.mulf %30, %27 : vector<32x256xf32>
    %32 = arith.select %29, %27, %31 : vector<32x256xi1>, vector<32x256xf32>
    %33 = arith.mulf %32, %32 : vector<32x256xf32>
    %34 = tpu.concatenate %32, %33 in 0 : vector<32x256xf32>, vector<32x256xf32> -> vector<64x256xf32>
    %cst_12 = arith.constant dense<0.000000e+00> : vector<64xf32>
    %35 = vector.multi_reduction <add>, %34, %cst_12 [1] : vector<64x256xf32> to vector<64xf32>
    %36 = vector.shape_cast %35 : vector<64xf32> to vector<64x1xf32>
    %37 = vector.extract_strided_slice %36 {offsets = [0, 0], sizes = [32, 1], strides = [1, 1]} : vector<64x1xf32> to vector<32x1xf32>
    %38 = vector.shape_cast %37 : vector<32x1xf32> to vector<1x32x1xf32>
    %cst_13 = arith.constant dense<0.000000e+00> : vector<1xf32>
    %39 = vector.multi_reduction <add>, %38, %cst_13 [1, 2] : vector<1x32x1xf32> to vector<1xf32>
    %40 = vector.shape_cast %39 : vector<1xf32> to vector<1x1x1xf32>
    %41 = vector.extract %40[0, 0, 0] : f32 from vector<1x1x1xf32>
    %42 = vector.extract_strided_slice %36 {offsets = [32, 0], sizes = [32, 1], strides = [1, 1]} : vector<64x1xf32> to vector<32x1xf32>
    %43 = vector.shape_cast %42 : vector<32x1xf32> to vector<1x32x1xf32>
    %cst_14 = arith.constant dense<0.000000e+00> : vector<1xf32>
    %44 = vector.multi_reduction <add>, %43, %cst_14 [1, 2] : vector<1x32x1xf32> to vector<1xf32>
    %45 = vector.shape_cast %44 : vector<1xf32> to vector<1x1x1xf32>
    %46 = vector.extract %45[0, 0, 0] : f32 from vector<1x1x1xf32>
    %cst_15 = arith.constant 1.22070313E-4 : f32
    %47 = arith.mulf %41, %cst_15 : f32
    %cst_16 = arith.constant 1.22070313E-4 : f32
    %48 = arith.mulf %46, %cst_16 : f32
    %49 = arith.mulf %47, %47 : f32
    %50 = arith.subf %48, %49 : f32
    %cst_17 = arith.constant 0.000000e+00 : f32
    %51 = arith.maximumf %50, %cst_17 : f32
    %cst_18 = arith.constant 9.99999993E-9 : f32
    %52 = arith.addf %51, %cst_18 : f32
    %53 = math.rsqrt %52 : f32
    %54 = vector.broadcast %53 : f32 to vector<32x1xf32>
    %55 = arith.mulf %7, %54 : vector<32x1xf32>
    %56 = vector.broadcast %47 : f32 to vector<32x1xf32>
    %57 = arith.mulf %56, %55 : vector<32x1xf32>
    %58 = arith.subf %8, %57 : vector<32x1xf32>
    %59 = vector.broadcast %55 : vector<32x1xf32> to vector<32x256xf32>
    %60 = arith.mulf %32, %59 : vector<32x256xf32>
    %61 = vector.broadcast %58 : vector<32x1xf32> to vector<32x256xf32>
    %62 = arith.addf %60, %61 : vector<32x256xf32>
    %c2_i32_19 = arith.constant 2 : i32
    %63 = tpu.dynamic_rotate %62 by %c2_i32_19 dim 1 : vector<32x256xf32>, i32 -> vector<32x256xf32>
    %64 = vector.broadcast %17 : vector<1x256xf32> to vector<32x256xf32>
    %65 = arith.mulf %63, %64 : vector<32x256xf32>
    %66 = vector.extract_strided_slice %12 {offsets = [0, 0], sizes = [32, 1], strides = [1, 1]} : vector<32x3xf32> to vector<32x1xf32>
    %67 = vector.broadcast %66 : vector<32x1xf32> to vector<32x256xf32>
    %68 = arith.mulf %67, %65 : vector<32x256xf32>
    %69 = vector.extract_strided_slice %12 {offsets = [0, 1], sizes = [32, 1], strides = [1, 1]} : vector<32x3xf32> to vector<32x1xf32>
    %70 = vector.broadcast %69 : vector<32x1xf32> to vector<32x256xf32>
    %71 = arith.mulf %70, %62 : vector<32x256xf32>
    %72 = arith.addf %68, %71 : vector<32x256xf32>
    %c254_i32_20 = arith.constant 254 : i32
    %73 = tpu.dynamic_rotate %62 by %c254_i32_20 dim 1 : vector<32x256xf32>, i32 -> vector<32x256xf32>
    %74 = vector.broadcast %21 : vector<1x256xf32> to vector<32x256xf32>
    %75 = arith.mulf %73, %74 : vector<32x256xf32>
    %76 = vector.extract_strided_slice %12 {offsets = [0, 2], sizes = [32, 1], strides = [1, 1]} : vector<32x3xf32> to vector<32x1xf32>
    %77 = vector.broadcast %76 : vector<32x1xf32> to vector<32x256xf32>
    %78 = arith.mulf %77, %75 : vector<32x256xf32>
    %79 = arith.addf %72, %78 : vector<32x256xf32>
    %80 = vector.broadcast %9 : vector<32x1xf32> to vector<32x256xf32>
    %81 = arith.addf %79, %80 : vector<32x256xf32>
    %cst_21 = arith.constant 0.000000e+00 : f32
    %82 = vector.broadcast %cst_21 : f32 to vector<32x256xf32>
    %83 = arith.cmpf oge, %81, %82 : vector<32x256xf32>
    %84 = vector.broadcast %1 : f32 to vector<32x256xf32>
    %85 = arith.mulf %84, %81 : vector<32x256xf32>
    %86 = arith.select %83, %81, %85 : vector<32x256xi1>, vector<32x256xf32>
    %87 = arith.mulf %86, %86 : vector<32x256xf32>
    %88 = tpu.concatenate %86, %87 in 0 : vector<32x256xf32>, vector<32x256xf32> -> vector<64x256xf32>
    %cst_22 = arith.constant dense<0.000000e+00> : vector<64xf32>
    %89 = vector.multi_reduction <add>, %88, %cst_22 [1] : vector<64x256xf32> to vector<64xf32>
    %90 = vector.shape_cast %89 : vector<64xf32> to vector<64x1xf32>
    %91 = vector.extract_strided_slice %90 {offsets = [0, 0], sizes = [32, 1], strides = [1, 1]} : vector<64x1xf32> to vector<32x1xf32>
    %92 = vector.shape_cast %91 : vector<32x1xf32> to vector<1x32x1xf32>
    %cst_23 = arith.constant dense<0.000000e+00> : vector<1xf32>
    %93 = vector.multi_reduction <add>, %92, %cst_23 [1, 2] : vector<1x32x1xf32> to vector<1xf32>
    %94 = vector.shape_cast %93 : vector<1xf32> to vector<1x1x1xf32>
    %95 = vector.extract %94[0, 0, 0] : f32 from vector<1x1x1xf32>
    %96 = vector.extract_strided_slice %90 {offsets = [32, 0], sizes = [32, 1], strides = [1, 1]} : vector<64x1xf32> to vector<32x1xf32>
    %97 = vector.shape_cast %96 : vector<32x1xf32> to vector<1x32x1xf32>
    %cst_24 = arith.constant dense<0.000000e+00> : vector<1xf32>
    %98 = vector.multi_reduction <add>, %97, %cst_24 [1, 2] : vector<1x32x1xf32> to vector<1xf32>
    %99 = vector.shape_cast %98 : vector<1xf32> to vector<1x1x1xf32>
    %100 = vector.extract %99[0, 0, 0] : f32 from vector<1x1x1xf32>
    %cst_25 = arith.constant 1.22070313E-4 : f32
    %101 = arith.mulf %95, %cst_25 : f32
    %cst_26 = arith.constant 1.22070313E-4 : f32
    %102 = arith.mulf %100, %cst_26 : f32
    %103 = arith.mulf %101, %101 : f32
    %104 = arith.subf %102, %103 : f32
    %cst_27 = arith.constant 0.000000e+00 : f32
    %105 = arith.maximumf %104, %cst_27 : f32
    %cst_28 = arith.constant 9.99999993E-9 : f32
    %106 = arith.addf %105, %cst_28 : f32
    %107 = math.rsqrt %106 : f32
    %108 = vector.broadcast %107 : f32 to vector<32x1xf32>
    %109 = arith.mulf %10, %108 : vector<32x1xf32>
    %110 = vector.broadcast %101 : f32 to vector<32x1xf32>
    %111 = arith.mulf %110, %109 : vector<32x1xf32>
    %112 = arith.subf %11, %111 : vector<32x1xf32>
    %113 = vector.broadcast %109 : vector<32x1xf32> to vector<32x256xf32>
    %114 = arith.mulf %86, %113 : vector<32x256xf32>
    %115 = vector.broadcast %112 : vector<32x1xf32> to vector<32x256xf32>
    %116 = arith.addf %114, %115 : vector<32x256xf32>
    %117 = arith.truncf %116 : vector<32x256xf32> to vector<32x256xbf16>
    %cst_29 = arith.constant dense<0.000000e+00> : vector<32x256xf32>
    %118 = tpu.matmul %3, %117, %cst_29 {dimension_numbers = #tpu.dot_dimension_numbers<[1], [0], [0], [1], [0, 0, 1, 1], [], []>} : vector<32x32xbf16>, vector<32x256xbf16>, vector<32x256xf32> -> vector<32x256xf32>
    %119 = vector.broadcast %4 : vector<32x1xf32> to vector<32x256xf32>
    %120 = arith.addf %118, %119 : vector<32x256xf32>
    %121 = vector.extract_strided_slice %120 {offsets = [0, 0], sizes = [16, 256], strides = [1, 1]} : vector<32x256xf32> to vector<16x256xf32>
    %c0_30 = arith.constant 0 : index
    %c0_31 = arith.constant 0 : index
    %c0_32 = arith.constant 0 : index
    %122 = vector.load %arg7[%c0_30, %c0_31, %c0_32] : memref<2x16x256xf32, #tpu.memory_space<vmem>>, vector<1x16x256xf32>
    %123 = vector.shape_cast %122 : vector<1x16x256xf32> to vector<16x256xf32>
    %124 = vector.shape_cast %121 : vector<16x256xf32> to vector<1x16x256xf32>
    tpu.vector_store %arg7[%c0_30, %c0_31, %c0_32], %124 {strides = array<i32>} : memref<2x16x256xf32, #tpu.memory_space<vmem>>, vector<1x16x256xf32>,
    %125 = vector.extract_strided_slice %120 {offsets = [16, 0], sizes = [16, 256], strides = [1, 1]} : vector<32x256xf32> to vector<16x256xf32>
    %c0_33 = arith.constant 0 : index
    %c0_34 = arith.constant 0 : index
    %c0_35 = arith.constant 0 : index
    %126 = vector.load %arg8[%c0_33, %c0_34, %c0_35] : memref<2x16x256xf32, #tpu.memory_space<vmem>>, vector<1x16x256xf32>
    %127 = vector.shape_cast %126 : vector<1x16x256xf32> to vector<16x256xf32>
    %128 = vector.shape_cast %125 : vector<16x256xf32> to vector<1x16x256xf32>
    tpu.vector_store %arg8[%c0_33, %c0_34, %c0_35], %128 {strides = array<i32>} : memref<2x16x256xf32, #tpu.memory_space<vmem>>, vector<1x16x256xf32>,
    %c1_36 = arith.constant 1 : index
    %c0_37 = arith.constant 0 : index
    %c0_38 = arith.constant 0 : index
    %129 = vector.load %arg1[%c1_36, %c0_37, %c0_38] : memref<2x16x256xf32, #tpu.memory_space<vmem>>, vector<1x16x256xf32>
    %130 = vector.shape_cast %129 : vector<1x16x256xf32> to vector<16x256xf32>
    %131 = arith.truncf %130 : vector<16x256xf32> to vector<16x256xbf16>
    %cst_39 = arith.constant dense<0.000000e+00> : vector<32x256xf32>
    %132 = tpu.matmul %2, %131, %cst_39 {dimension_numbers = #tpu.dot_dimension_numbers<[1], [0], [0], [1], [0, 0, 1, 1], [], []>} : vector<32x16xbf16>, vector<16x256xbf16>, vector<32x256xf32> -> vector<32x256xf32>
    %133 = vector.broadcast %6 : vector<32x1xf32> to vector<32x256xf32>
    %134 = arith.addf %132, %133 : vector<32x256xf32>
    %cst_40 = arith.constant 0.000000e+00 : f32
    %135 = vector.broadcast %cst_40 : f32 to vector<32x256xf32>
    %136 = arith.cmpf oge, %134, %135 : vector<32x256xf32>
    %137 = vector.broadcast %0 : f32 to vector<32x256xf32>
    %138 = arith.mulf %137, %134 : vector<32x256xf32>
    %139 = arith.select %136, %134, %138 : vector<32x256xi1>, vector<32x256xf32>
    %140 = arith.mulf %139, %139 : vector<32x256xf32>
    %141 = tpu.concatenate %139, %140 in 0 : vector<32x256xf32>, vector<32x256xf32> -> vector<64x256xf32>
    %cst_41 = arith.constant dense<0.000000e+00> : vector<64xf32>
    %142 = vector.multi_reduction <add>, %141, %cst_41 [1] : vector<64x256xf32> to vector<64xf32>
    %143 = vector.shape_cast %142 : vector<64xf32> to vector<64x1xf32>
    %144 = vector.extract_strided_slice %143 {offsets = [0, 0], sizes = [32, 1], strides = [1, 1]} : vector<64x1xf32> to vector<32x1xf32>
    %145 = vector.shape_cast %144 : vector<32x1xf32> to vector<1x32x1xf32>
    %cst_42 = arith.constant dense<0.000000e+00> : vector<1xf32>
    %146 = vector.multi_reduction <add>, %145, %cst_42 [1, 2] : vector<1x32x1xf32> to vector<1xf32>
    %147 = vector.shape_cast %146 : vector<1xf32> to vector<1x1x1xf32>
    %148 = vector.extract %147[0, 0, 0] : f32 from vector<1x1x1xf32>
    %149 = vector.extract_strided_slice %143 {offsets = [32, 0], sizes = [32, 1], strides = [1, 1]} : vector<64x1xf32> to vector<32x1xf32>
    %150 = vector.shape_cast %149 : vector<32x1xf32> to vector<1x32x1xf32>
    %cst_43 = arith.constant dense<0.000000e+00> : vector<1xf32>
    %151 = vector.multi_reduction <add>, %150, %cst_43 [1, 2] : vector<1x32x1xf32> to vector<1xf32>
    %152 = vector.shape_cast %151 : vector<1xf32> to vector<1x1x1xf32>
    %153 = vector.extract %152[0, 0, 0] : f32 from vector<1x1x1xf32>
    %cst_44 = arith.constant 1.22070313E-4 : f32
    %154 = arith.mulf %148, %cst_44 : f32
    %cst_45 = arith.constant 1.22070313E-4 : f32
    %155 = arith.mulf %153, %cst_45 : f32
    %156 = arith.mulf %154, %154 : f32
    %157 = arith.subf %155, %156 : f32
    %cst_46 = arith.constant 0.000000e+00 : f32
    %158 = arith.maximumf %157, %cst_46 : f32
    %cst_47 = arith.constant 9.99999993E-9 : f32
    %159 = arith.addf %158, %cst_47 : f32
    %160 = math.rsqrt %159 : f32
    %161 = vector.broadcast %160 : f32 to vector<32x1xf32>
    %162 = arith.mulf %7, %161 : vector<32x1xf32>
    %163 = vector.broadcast %154 : f32 to vector<32x1xf32>
    %164 = arith.mulf %163, %162 : vector<32x1xf32>
    %165 = arith.subf %8, %164 : vector<32x1xf32>
    %166 = vector.broadcast %162 : vector<32x1xf32> to vector<32x256xf32>
    %167 = arith.mulf %139, %166 : vector<32x256xf32>
    %168 = vector.broadcast %165 : vector<32x1xf32> to vector<32x256xf32>
    %169 = arith.addf %167, %168 : vector<32x256xf32>
    %c2_i32_48 = arith.constant 2 : i32
    %170 = tpu.dynamic_rotate %169 by %c2_i32_48 dim 1 : vector<32x256xf32>, i32 -> vector<32x256xf32>
    %171 = vector.broadcast %17 : vector<1x256xf32> to vector<32x256xf32>
    %172 = arith.mulf %170, %171 : vector<32x256xf32>
    %173 = vector.extract_strided_slice %12 {offsets = [0, 0], sizes = [32, 1], strides = [1, 1]} : vector<32x3xf32> to vector<32x1xf32>
    %174 = vector.broadcast %173 : vector<32x1xf32> to vector<32x256xf32>
    %175 = arith.mulf %174, %172 : vector<32x256xf32>
    %176 = vector.extract_strided_slice %12 {offsets = [0, 1], sizes = [32, 1], strides = [1, 1]} : vector<32x3xf32> to vector<32x1xf32>
    %177 = vector.broadcast %176 : vector<32x1xf32> to vector<32x256xf32>
    %178 = arith.mulf %177, %169 : vector<32x256xf32>
    %179 = arith.addf %175, %178 : vector<32x256xf32>
    %c254_i32_49 = arith.constant 254 : i32
    %180 = tpu.dynamic_rotate %169 by %c254_i32_49 dim 1 : vector<32x256xf32>, i32 -> vector<32x256xf32>
    %181 = vector.broadcast %21 : vector<1x256xf32> to vector<32x256xf32>
    %182 = arith.mulf %180, %181 : vector<32x256xf32>
    %183 = vector.extract_strided_slice %12 {offsets = [0, 2], sizes = [32, 1], strides = [1, 1]} : vector<32x3xf32> to vector<32x1xf32>
    %184 = vector.broadcast %183 : vector<32x1xf32> to vector<32x256xf32>
    %185 = arith.mulf %184, %182 : vector<32x256xf32>
    %186 = arith.addf %179, %185 : vector<32x256xf32>
    %187 = vector.broadcast %9 : vector<32x1xf32> to vector<32x256xf32>
    %188 = arith.addf %186, %187 : vector<32x256xf32>
    %cst_50 = arith.constant 0.000000e+00 : f32
    %189 = vector.broadcast %cst_50 : f32 to vector<32x256xf32>
    %190 = arith.cmpf oge, %188, %189 : vector<32x256xf32>
    %191 = vector.broadcast %1 : f32 to vector<32x256xf32>
    %192 = arith.mulf %191, %188 : vector<32x256xf32>
    %193 = arith.select %190, %188, %192 : vector<32x256xi1>, vector<32x256xf32>
    %194 = arith.mulf %193, %193 : vector<32x256xf32>
    %195 = tpu.concatenate %193, %194 in 0 : vector<32x256xf32>, vector<32x256xf32> -> vector<64x256xf32>
    %cst_51 = arith.constant dense<0.000000e+00> : vector<64xf32>
    %196 = vector.multi_reduction <add>, %195, %cst_51 [1] : vector<64x256xf32> to vector<64xf32>
    %197 = vector.shape_cast %196 : vector<64xf32> to vector<64x1xf32>
    %198 = vector.extract_strided_slice %197 {offsets = [0, 0], sizes = [32, 1], strides = [1, 1]} : vector<64x1xf32> to vector<32x1xf32>
    %199 = vector.shape_cast %198 : vector<32x1xf32> to vector<1x32x1xf32>
    %cst_52 = arith.constant dense<0.000000e+00> : vector<1xf32>
    %200 = vector.multi_reduction <add>, %199, %cst_52 [1, 2] : vector<1x32x1xf32> to vector<1xf32>
    %201 = vector.shape_cast %200 : vector<1xf32> to vector<1x1x1xf32>
    %202 = vector.extract %201[0, 0, 0] : f32 from vector<1x1x1xf32>
    %203 = vector.extract_strided_slice %197 {offsets = [32, 0], sizes = [32, 1], strides = [1, 1]} : vector<64x1xf32> to vector<32x1xf32>
    %204 = vector.shape_cast %203 : vector<32x1xf32> to vector<1x32x1xf32>
    %cst_53 = arith.constant dense<0.000000e+00> : vector<1xf32>
    %205 = vector.multi_reduction <add>, %204, %cst_53 [1, 2] : vector<1x32x1xf32> to vector<1xf32>
    %206 = vector.shape_cast %205 : vector<1xf32> to vector<1x1x1xf32>
    %207 = vector.extract %206[0, 0, 0] : f32 from vector<1x1x1xf32>
    %cst_54 = arith.constant 1.22070313E-4 : f32
    %208 = arith.mulf %202, %cst_54 : f32
    %cst_55 = arith.constant 1.22070313E-4 : f32
    %209 = arith.mulf %207, %cst_55 : f32
    %210 = arith.mulf %208, %208 : f32
    %211 = arith.subf %209, %210 : f32
    %cst_56 = arith.constant 0.000000e+00 : f32
    %212 = arith.maximumf %211, %cst_56 : f32
    %cst_57 = arith.constant 9.99999993E-9 : f32
    %213 = arith.addf %212, %cst_57 : f32
    %214 = math.rsqrt %213 : f32
    %215 = vector.broadcast %214 : f32 to vector<32x1xf32>
    %216 = arith.mulf %10, %215 : vector<32x1xf32>
    %217 = vector.broadcast %208 : f32 to vector<32x1xf32>
    %218 = arith.mulf %217, %216 : vector<32x1xf32>
    %219 = arith.subf %11, %218 : vector<32x1xf32>
    %220 = vector.broadcast %216 : vector<32x1xf32> to vector<32x256xf32>
    %221 = arith.mulf %193, %220 : vector<32x256xf32>
    %222 = vector.broadcast %219 : vector<32x1xf32> to vector<32x256xf32>
    %223 = arith.addf %221, %222 : vector<32x256xf32>
    %224 = arith.truncf %223 : vector<32x256xf32> to vector<32x256xbf16>
    %cst_58 = arith.constant dense<0.000000e+00> : vector<32x256xf32>
    %225 = tpu.matmul %3, %224, %cst_58 {dimension_numbers = #tpu.dot_dimension_numbers<[1], [0], [0], [1], [0, 0, 1, 1], [], []>} : vector<32x32xbf16>, vector<32x256xbf16>, vector<32x256xf32> -> vector<32x256xf32>
    %226 = vector.broadcast %4 : vector<32x1xf32> to vector<32x256xf32>
    %227 = arith.addf %225, %226 : vector<32x256xf32>
    %228 = vector.extract_strided_slice %227 {offsets = [0, 0], sizes = [16, 256], strides = [1, 1]} : vector<32x256xf32> to vector<16x256xf32>
    %c1_59 = arith.constant 1 : index
    %c0_60 = arith.constant 0 : index
    %c0_61 = arith.constant 0 : index
    %229 = vector.load %arg7[%c1_59, %c0_60, %c0_61] : memref<2x16x256xf32, #tpu.memory_space<vmem>>, vector<1x16x256xf32>
    %230 = vector.shape_cast %229 : vector<1x16x256xf32> to vector<16x256xf32>
    %231 = vector.shape_cast %228 : vector<16x256xf32> to vector<1x16x256xf32>
    tpu.vector_store %arg7[%c1_59, %c0_60, %c0_61], %231 {strides = array<i32>} : memref<2x16x256xf32, #tpu.memory_space<vmem>>, vector<1x16x256xf32>,
    %232 = vector.extract_strided_slice %227 {offsets = [16, 0], sizes = [16, 256], strides = [1, 1]} : vector<32x256xf32> to vector<16x256xf32>
    %c1_62 = arith.constant 1 : index
    %c0_63 = arith.constant 0 : index
    %c0_64 = arith.constant 0 : index
    %233 = vector.load %arg8[%c1_62, %c0_63, %c0_64] : memref<2x16x256xf32, #tpu.memory_space<vmem>>, vector<1x16x256xf32>
    %234 = vector.shape_cast %233 : vector<1x16x256xf32> to vector<16x256xf32>
    %235 = vector.shape_cast %232 : vector<16x256xf32> to vector<1x16x256xf32>
    tpu.vector_store %arg8[%c1_62, %c0_63, %c0_64], %235 {strides = array<i32>} : memref<2x16x256xf32, #tpu.memory_space<vmem>>, vector<1x16x256xf32>,
    return
  }
  func.func @transform_0(%arg0: i32) -> (i32, i32, i32) {
    %c0_i32 = arith.constant 0 : i32
    %c0_i32_0 = arith.constant 0 : i32
    %c0_i32_1 = arith.constant 0 : i32
    return %arg0, %c0_i32, %c0_i32_0 : i32, i32, i32
  }
  func.func @transform_1(%arg0: i32) -> i32 {
    %c0_i32 = arith.constant 0 : i32
    %c0_i32_0 = arith.constant 0 : i32
    return %c0_i32 : i32
  }
  func.func @transform_2(%arg0: i32) -> (i32, i32) {
    %c0_i32 = arith.constant 0 : i32
    %c0_i32_0 = arith.constant 0 : i32
    %c0_i32_1 = arith.constant 0 : i32
    return %c0_i32, %c0_i32_0 : i32, i32
  }
  func.func @transform_3(%arg0: i32) -> (i32, i32) {
    %c0_i32 = arith.constant 0 : i32
    %c0_i32_0 = arith.constant 0 : i32
    %c0_i32_1 = arith.constant 0 : i32
    return %c0_i32, %c0_i32_0 : i32, i32
  }
  func.func @transform_4(%arg0: i32) -> (i32, i32) {
    %c0_i32 = arith.constant 0 : i32
    %c0_i32_0 = arith.constant 0 : i32
    %c0_i32_1 = arith.constant 0 : i32
    return %c0_i32, %c0_i32_0 : i32, i32
  }
  func.func @transform_5(%arg0: i32) -> (i32, i32) {
    %c0_i32 = arith.constant 0 : i32
    %c0_i32_0 = arith.constant 0 : i32
    %c0_i32_1 = arith.constant 0 : i32
    return %c0_i32, %c0_i32_0 : i32, i32
  }
  func.func @transform_6(%arg0: i32) -> (i32, i32, i32) {
    %c0_i32 = arith.constant 0 : i32
    %c0_i32_0 = arith.constant 0 : i32
    %c0_i32_1 = arith.constant 0 : i32
    return %arg0, %c0_i32, %c0_i32_0 : i32, i32, i32
  }
  func.func @transform_7(%arg0: i32) -> (i32, i32, i32) {
    %c0_i32 = arith.constant 0 : i32
    %c0_i32_0 = arith.constant 0 : i32
    %c0_i32_1 = arith.constant 0 : i32
    return %arg0, %c0_i32, %c0_i32_0 : i32, i32, i32
  }
}

</mosaic_0001>

<llo_original>
// kernel: tpu_custom_call.1
$region0: #{tpu_custom_call.1}
  #allocation0 [shape = 'u32[]', space=smem, size = 0x4, offset = 0x4, fixed_abs, tag = 'smem constant byte address 0x4 - core index']
  #allocation1 [shape = 'u32[72,128]{1,0:T(1,128)}', space=vmem, size = 0x9000, scoped, tag = 'internal scratch']
  %s0 = inlined_call_operand.hbm [shape: f32[4,16,256], index: 0, kind: input, shape index: {}]
  %s1 = inlined_call_operand.vmem [shape: f32[2], index: 1, kind: input, shape index: {}]
  %s2 = inlined_call_operand.vmem [shape: bf16[32,16], index: 2, kind: input, shape index: {}]
  %s3 = inlined_call_operand.vmem [shape: bf16[32,32], index: 3, kind: input, shape index: {}]
  %s4 = inlined_call_operand.vmem [shape: f32[32,1], index: 4, kind: input, shape index: {}]
  %s5 = inlined_call_operand.vmem [shape: f32[32,9], index: 5, kind: input, shape index: {}]
  %s6 = inlined_call_operand.hbm [shape: f32[4,16,256], index: 6, kind: output, shape index: {0}]
  %s7 = inlined_call_operand.hbm [shape: f32[4,16,256], index: 7, kind: output, shape index: {1}]
  %8 = xla_tuple %s6, %s7
  %s9 = sld [smem:[#allocation0]]
  $region73: #{tpu_custom_call.1} parent=0
    _
  %s11 = ssub.s32 1, %s9
  %s12 = scalar_select 0, %s11, %s9
  $region1: #{tpu_custom_call.1} parent=0
    #allocation2 [shape = 'u8[65536]{0}', space=vmem, size = 0x10000, scoped, tag = 'input window, operand 0']
    #allocation3 [shape = 's32[2]{0}', space=sflag, size = 0x8, scoped, tag = 'scoped memory for tpu_custom_call.1']
    #allocation4 [shape = 's32[2]{0}', space=sflag, size = 0x8, scoped, tag = 'scoped memory for tpu_custom_call.1']
    #allocation5 [shape = 's32[2]{0}', space=sflag, size = 0x8, scoped, tag = 'scoped memory for tpu_custom_call.1']
    #allocation6 [shape = 'u8[512]{0}', space=smem, size = 0x200, scoped, tag = 'input window, operand 1, single buffered']
    #allocation7 [shape = 'u8[65536]{0}', space=vmem, size = 0x10000, scoped, tag = 'output window, operand 0']
    #allocation8 [shape = 'u8[65536]{0}', space=vmem, size = 0x10000, scoped, tag = 'output window, operand 1']
    #allocation9 [shape = 's32[2]{0}', space=sflag, size = 0x8, scoped, tag = 'scoped memory for tpu_custom_call.1']
    %13 = vsyncpa [#allocation3], 0
    %s14 = scalar_lea.sflag [#allocation3], 1
    %15 = vsyncpa %s14, 0
    %16 = vsyncpa [#allocation5], 0
    %17 = vsyncpa [#allocation4], 0
    %s18 = scalar_lea.sflag [#allocation4], 1
    %19 = vsyncpa %s18, 0
    %20 = vsyncpa [#allocation9], 0
    %s21 = scalar_lea.sflag [#allocation9], 1
    %22 = vsyncpa %s21, 0
    loop: start=0, step=1, limit=4
    $region2: #{tpu_custom_call.1} parent=1 // loop_pre_header
      _
    $region3: #{tpu_custom_call.1} parent=1 // loop_header
      %s24 = sphi 0, %s28
      %p25 = scmp.ge.s32.totalorder %s24, 4
      %s34 = sphi 0, %s36
      %s37 = sphi 0, %s34
      %s38 = sphi 0, %s37
      %s54 = sphi 0, %s38
      %s58 = sphi 0, %s58
      %s60 = sphi 0, %s58
      %s61 = sphi 0, %s60
      %s75 = sphi 0, %s61
      %s79 = sphi 0, %s79
      %s81 = sphi 0, %s79
      %s82 = sphi 0, %s81
      %s96 = sphi 0, %s82
      %s100 = sphi 0, %s100
      %s102 = sphi 0, %s100
      %s103 = sphi 0, %s102
      %s117 = sphi 0, %s103
      %s121 = sphi 0, %s121
      %s123 = sphi 0, %s121
      %s124 = sphi 0, %s123
      %s138 = sphi 0, %s124
      %s142 = sphi 0, %s142
      %s144 = sphi 0, %s142
      %s145 = sphi 0, %s144
      %s159 = sphi 0, %s145
      %s165 = sphi 0, %s167
      %s168 = sphi 0, %s165
      %s169 = sphi 0, %s168
      %s185 = sphi 0, %s169
      %s191 = sphi 0, %s193
      %s194 = sphi 0, %s191
      %s195 = sphi 0, %s194
      %s211 = sphi 0, %s195
    $region4: #{tpu_custom_call.1} parent=1 // loop_header_branch
      %27 = sbr.rel (%p25) target = $region8
    $region5: #{tpu_custom_call.1} parent=1 // loop_body
      %s29 = ssub.s32 %s24, 1
      %s30 = ssub.s32 %s24, 2
      %s31 = sadd.s32 %s24, 1
      %s32 = ssub.s32 %s24, %s31
      %p33 = scmp.eq.s32.totalorder %s32, 0
      %s35 = sadd.s32 %s34, 1
      %s36 = scalar_select %p33, %s34, %s35
      %p39 = pneg %p33
      %p40 = scmp.eq.s32.totalorder %s24, 1
      %p41 = por %p39, %p40
      %p42 = scmp.ne.s32.totalorder %s34, %s37
      %p43 = scmp.eq.s32.totalorder %s24, 0
      %p44 = por %p42, %p43
      %p45 = scmp.ne.s32.totalorder %s34, %s37
      %p46 = scmp.eq.s32.totalorder %s29, 1
      %p47 = por %p45, %p46
      %p48 = scmp.ne.s32.totalorder %s37, %s38
      %p49 = scmp.eq.s32.totalorder %s29, 0
      %p50 = por %p48, %p49
      %p51 = scmp.ne.s32.totalorder %s37, %s38
      %p52 = scmp.eq.s32.totalorder %s30, 1
      %p53 = por %p51, %p52
      %p55 = scmp.ne.s32.totalorder %s38, %s54
      %p56 = scmp.eq.s32.totalorder %s30, 0
      %p57 = por %p55, %p56
      %s59 = sadd.s32 %s58, 1
      %p62 = scmp.eq.s32.totalorder %s24, 1
      %p63 = scmp.ne.s32.totalorder %s58, %s60
      %p64 = scmp.eq.s32.totalorder %s24, 0
      %p65 = por %p63, %p64
      %p66 = scmp.ne.s32.totalorder %s58, %s60
      %p67 = scmp.eq.s32.totalorder %s29, 1
      %p68 = por %p66, %p67
      %p69 = scmp.ne.s32.totalorder %s60, %s61
      %p70 = scmp.eq.s32.totalorder %s29, 0
      %p71 = por %p69, %p70
      %p72 = scmp.ne.s32.totalorder %s60, %s61
      %p73 = scmp.eq.s32.totalorder %s30, 1
      %p74 = por %p72, %p73
      %p76 = scmp.ne.s32.totalorder %s61, %s75
      %p77 = scmp.eq.s32.totalorder %s30, 0
      %p78 = por %p76, %p77
      %s80 = sadd.s32 %s79, 1
      %p83 = scmp.eq.s32.totalorder %s24, 1
      %p84 = scmp.ne.s32.totalorder %s79, %s81
      %p85 = scmp.eq.s32.totalorder %s24, 0
      %p86 = por %p84, %p85
      %p87 = scmp.ne.s32.totalorder %s79, %s81
      %p88 = scmp.eq.s32.totalorder %s29, 1
      %p89 = por %p87, %p88
      %p90 = scmp.ne.s32.totalorder %s81, %s82
      %p91 = scmp.eq.s32.totalorder %s29, 0
      %p92 = por %p90, %p91
      %p93 = scmp.ne.s32.totalorder %s81, %s82
      %p94 = scmp.eq.s32.totalorder %s30, 1
      %p95 = por %p93, %p94
      %p97 = scmp.ne.s32.totalorder %s82, %s96
      %p98 = scmp.eq.s32.totalorder %s30, 0
      %p99 = por %p97, %p98
      %s101 = sadd.s32 %s100, 1
      %p104 = scmp.eq.s32.totalorder %s24, 1
      %p105 = scmp.ne.s32.totalorder %s100, %s102
      %p106 = scmp.eq.s32.totalorder %s24, 0
      %p107 = por %p105, %p106
      %p108 = scmp.ne.s32.totalorder %s100, %s102
      %p109 = scmp.eq.s32.totalorder %s29, 1
      %p110 = por %p108, %p109
      %p111 = scmp.ne.s32.totalorder %s102, %s103
      %p112 = scmp.eq.s32.totalorder %s29, 0
      %p113 = por %p111, %p112
      %p114 = scmp.ne.s32.totalorder %s102, %s103
      %p115 = scmp.eq.s32.totalorder %s30, 1
      %p116 = por %p114, %p115
      %p118 = scmp.ne.s32.totalorder %s103, %s117
      %p119 = scmp.eq.s32.totalorder %s30, 0
      %p120 = por %p118, %p119
      %s122 = sadd.s32 %s121, 1
      %p125 = scmp.eq.s32.totalorder %s24, 1
      %p126 = scmp.ne.s32.totalorder %s121, %s123
      %p127 = scmp.eq.s32.totalorder %s24, 0
      %p128 = por %p126, %p127
      %p129 = scmp.ne.s32.totalorder %s121, %s123
      %p130 = scmp.eq.s32.totalorder %s29, 1
      %p131 = por %p129, %p130
      %p132 = scmp.ne.s32.totalorder %s123, %s124
      %p133 = scmp.eq.s32.totalorder %s29, 0
      %p134 = por %p132, %p133
      %p135 = scmp.ne.s32.totalorder %s123, %s124
      %p136 = scmp.eq.s32.totalorder %s30, 1
      %p137 = por %p135, %p136
      %p139 = scmp.ne.s32.totalorder %s124, %s138
      %p140 = scmp.eq.s32.totalorder %s30, 0
      %p141 = por %p139, %p140
      %s143 = sadd.s32 %s142, 1
      %p146 = scmp.eq.s32.totalorder %s24, 1
      %p147 = scmp.ne.s32.totalorder %s142, %s144
      %p148 = scmp.eq.s32.totalorder %s24, 0
      %p149 = por %p147, %p148
      %p150 = scmp.ne.s32.totalorder %s142, %s144
      %p151 = scmp.eq.s32.totalorder %s29, 1
      %p152 = por %p150, %p151
      %p153 = scmp.ne.s32.totalorder %s144, %s145
      %p154 = scmp.eq.s32.totalorder %s29, 0
      %p155 = por %p153, %p154
      %p156 = scmp.ne.s32.totalorder %s144, %s145
      %p157 = scmp.eq.s32.totalorder %s30, 1
      %p158 = por %p156, %p157
      %p160 = scmp.ne.s32.totalorder %s145, %s159
      %p161 = scmp.eq.s32.totalorder %s30, 0
      %p162 = por %p160, %p161
      %s163 = ssub.s32 %s24, %s31
      %p164 = scmp.eq.s32.totalorder %s163, 0
      %s166 = sadd.s32 %s165, 1
      %s167 = scalar_select %p164, %s165, %s166
      %p170 = pneg %p164
      %p171 = scmp.eq.s32.totalorder %s24, 1
      %p172 = por %p170, %p171
      %p173 = scmp.ne.s32.totalorder %s165, %s168
      %p174 = scmp.eq.s32.totalorder %s24, 0
      %p175 = por %p173, %p174
      %p176 = scmp.ne.s32.totalorder %s165, %s168
      %p177 = scmp.eq.s32.totalorder %s29, 1
      %p178 = por %p176, %p177
      %p179 = scmp.ne.s32.totalorder %s168, %s169
      %p180 = scmp.eq.s32.totalorder %s29, 0
      %p181 = por %p179, %p180
      %p182 = scmp.ne.s32.totalorder %s168, %s169
      %p183 = scmp.eq.s32.totalorder %s30, 1
      %p184 = por %p182, %p183
      %p186 = scmp.ne.s32.totalorder %s169, %s185
      %p187 = scmp.eq.s32.totalorder %s30, 0
      %p188 = por %p186, %p187
      %s189 = ssub.s32 %s24, %s31
      %p190 = scmp.eq.s32.totalorder %s189, 0
      %s192 = sadd.s32 %s191, 1
      %s193 = scalar_select %p190, %s191, %s192
      %p196 = pneg %p190
      %p197 = scmp.eq.s32.totalorder %s24, 1
      %p198 = por %p196, %p197
      %p199 = scmp.ne.s32.totalorder %s191, %s194
      %p200 = scmp.eq.s32.totalorder %s24, 0
      %p201 = por %p199, %p200
      %p202 = scmp.ne.s32.totalorder %s191, %s194
      %p203 = scmp.eq.s32.totalorder %s29, 1
      %p204 = por %p202, %p203
      %p205 = scmp.ne.s32.totalorder %s194, %s195
      %p206 = scmp.eq.s32.totalorder %s29, 0
      %p207 = por %p205, %p206
      %p208 = scmp.ne.s32.totalorder %s194, %s195
      %p209 = scmp.eq.s32.totalorder %s30, 1
      %p210 = por %p208, %p209
      %p212 = scmp.ne.s32.totalorder %s195, %s211
      %p213 = scmp.eq.s32.totalorder %s30, 0
      %p214 = por %p212, %p213
      %p215 = scmp.le.s32.totalorder 1, %s24
      %p216 = scmp.lt.s32.totalorder %s24, 3
      %p217 = pnand %p215, %p216
      %p218 = pneg %p217
      // Predicated region
      $region9: #{tpu_custom_call.1} parent=5 // pred_check
        _
      $region10: #{tpu_custom_call.1} parent=5 // pred_check_branch
        %220 = sbr.rel (%p217) target = $region12
      $region11: #{tpu_custom_call.1} parent=5 // pred_region
        %s221 = ssub.s32 %s24, 1
        // Predicated region
        $region13: #{tpu_custom_call.1} parent=11 // pred_check
          %p222 = pneg %p71
        $region14: #{tpu_custom_call.1} parent=11 // pred_check_branch
          %224 = sbr.rel (%p222) target = $region16
        $region15: #{tpu_custom_call.1} parent=11 // pred_region
          %226 = vsyncadd [#allocation5], 0
          %s228 = sshll.u32 %s1, 4
          %s229 = int_to_ptr.vmem [resolvable:$true] %s228
          %231 = dma.vmem_to_smem %s229, 16, [#allocation6], [#allocation5]
        $region16: #{tpu_custom_call.1} parent=11 // pred_fallthru
          _
        // Predicated region
        $region17: #{tpu_custom_call.1} parent=11 // pred_check
          %p232 = pneg %p92
        $region18: #{tpu_custom_call.1} parent=11 // pred_check_branch
          %234 = sbr.rel (%p232) target = $region20
        $region19: #{tpu_custom_call.1} parent=11 // pred_region
          _
        $region20: #{tpu_custom_call.1} parent=11 // pred_fallthru
          _
        // Predicated region
        $region21: #{tpu_custom_call.1} parent=11 // pred_check
          %p235 = pneg %p113
        $region22: #{tpu_custom_call.1} parent=11 // pred_check_branch
          %237 = sbr.rel (%p235) target = $region24
        $region23: #{tpu_custom_call.1} parent=11 // pred_region
          _
        $region24: #{tpu_custom_call.1} parent=11 // pred_fallthru
          _
        // Predicated region
        $region25: #{tpu_custom_call.1} parent=11 // pred_check
          %p238 = pneg %p134
        $region26: #{tpu_custom_call.1} parent=11 // pred_check_branch
          %240 = sbr.rel (%p238) target = $region28
        $region27: #{tpu_custom_call.1} parent=11 // pred_region
          _
        $region28: #{tpu_custom_call.1} parent=11 // pred_fallthru
          _
        // Predicated region
        $region29: #{tpu_custom_call.1} parent=11 // pred_check
          %p241 = pneg %p155
        $region30: #{tpu_custom_call.1} parent=11 // pred_check_branch
          %243 = sbr.rel (%p241) target = $region32
        $region31: #{tpu_custom_call.1} parent=11 // pred_region
          _
        $region32: #{tpu_custom_call.1} parent=11 // pred_fallthru
          _
      $region12: #{tpu_custom_call.1} parent=5 // pred_fallthru
        _
      %p244 = scmp.lt.s32.totalorder %s24, 2
      // Predicated region
      $region33: #{tpu_custom_call.1} parent=5 // pred_check
        %p245 = pneg %p244
      $region34: #{tpu_custom_call.1} parent=5 // pred_check_branch
        %247 = sbr.rel (%p245) target = $region36
      $region35: #{tpu_custom_call.1} parent=5 // pred_region
        // Predicated region
        $region37: #{tpu_custom_call.1} parent=35 // pred_check
          %p248 = pneg %p44
        $region38: #{tpu_custom_call.1} parent=35 // pred_check_branch
          %250 = sbr.rel (%p248) target = $region40
        $region39: #{tpu_custom_call.1} parent=35 // pred_region
          %s251 = sand.u32 %s34, 1
          %s252 = scalar_lea.sflag [#allocation3], %s251
          %s253 = sand.u32 %s34, 1
          %s254 = smul.addr %s253, 64
          %s255 = scalar_lea.vmem [#allocation2], %s254
          %s256 = smul.u32 2, %s24
          %258 = vsyncadd %s252, 0
          %s259 = smul.addr %s256, 4
          %s260 = smul.addr %s259, 8
          %s261 = scalar_lea.hbm %s0, %s260
          %s262 = sshll.u32 %s261, 4
          %s263 = int_to_ptr.hbm [resolvable:$true] %s262
          %s264 = sshll.u32 %s255, 4
          %s265 = int_to_ptr.vmem [resolvable:$true] %s264
          %270 = dma.hbm_to_vmem [thread:$0]  %s263, 1024, %s265, %s252, 256, 256, 16
        $region40: #{tpu_custom_call.1} parent=35 // pred_fallthru
          _
      $region36: #{tpu_custom_call.1} parent=5 // pred_fallthru
        _
      %p271 = scmp.le.s32.totalorder 1, %s24
      %p272 = scmp.lt.s32.totalorder %s24, 3
      %p273 = pnand %p271, %p272
      %p274 = pneg %p273
      // Predicated region
      $region41: #{tpu_custom_call.1} parent=5 // pred_check
        _
      $region42: #{tpu_custom_call.1} parent=5 // pred_check_branch
        %276 = sbr.rel (%p273) target = $region44
      $region43: #{tpu_custom_call.1} parent=5 // pred_region
        %s277 = ssub.s32 %s24, 1
        %s278 = sand.u32 %s37, 1
        %s279 = scalar_lea.sflag [#allocation3], %s278
        %s280 = sand.u32 %s37, 1
        %s281 = smul.addr %s280, 64
        %s282 = scalar_lea.vmem [#allocation2], %s281
        // Predicated region
        $region45: #{tpu_custom_call.1} parent=43 // pred_check
          %p283 = pneg %p50
        $region46: #{tpu_custom_call.1} parent=43 // pred_check_branch
          %285 = sbr.rel (%p283) target = $region48
        $region47: #{tpu_custom_call.1} parent=43 // pred_region
          %287 = dma.done %s279, 1024
        $region48: #{tpu_custom_call.1} parent=43 // pred_fallthru
          _
        // Predicated region
        $region49: #{tpu_custom_call.1} parent=43 // pred_check
          %p288 = pneg %p71
        $region50: #{tpu_custom_call.1} parent=43 // pred_check_branch
          %290 = sbr.rel (%p288) target = $region52
        $region51: #{tpu_custom_call.1} parent=43 // pred_region
          %292 = dma.done [#allocation5], 16
        $region52: #{tpu_custom_call.1} parent=43 // pred_fallthru
          _
        %293 = sfence
        %s294 = sand.u32 %s37, 1
        %s295 = scalar_lea.sflag [#allocation3], %s294
        %s296 = sand.u32 %s37, 1
        %s297 = smul.addr %s296, 64
        %s298 = scalar_lea.vmem [#allocation2], %s297
        %p299 = pneg %p50
        %p300 = pneg %p47
        %p301 = pneg %p71
        %p302 = pneg %p68
        %p303 = pneg %p92
        %p304 = pneg %p89
        %p305 = pneg %p113
        %p306 = pneg %p110
        %p307 = pneg %p134
        %p308 = pneg %p131
        %p309 = pneg %p155
        %p310 = pneg %p152
        %p311 = pneg %p181
        %p312 = pneg %p178
        %s313 = sand.u32 %s168, 1
        %s314 = scalar_lea.sflag [#allocation4], %s313
        %s315 = sand.u32 %s168, 1
        %s316 = smul.addr %s315, 64
        %s317 = scalar_lea.vmem [#allocation7], %s316
        %p318 = pneg %p207
        %p319 = pneg %p204
        %s320 = sand.u32 %s194, 1
        %s321 = scalar_lea.sflag [#allocation9], %s320
        %s322 = sand.u32 %s194, 1
        %s323 = smul.addr %s322, 64
        %s324 = scalar_lea.vmem [#allocation8], %s323
        %s325 = smul.u32 2, %s29
        %s326 = smul.u32 2, %s29
        %s327 = smul.u32 2, %s29
        %s329 = sld [smem:[#allocation6]]
        %s330 = sld [smem:[#allocation6 + $0x1]]
        %v331 = vld [vmem:[%s2] sm:$0xf]
        %v332 = vld [vmem:[%s2 + $0x4] sm:$0xf]
        %v333 = vld [vmem:[%s2 + $0x8] sm:$0xf]
        %v334 = vld [vmem:[%s2 + $0xc] sm:$0xf]
        %v335 = vld [vmem:[%s3] sm:$0xf]
        %v336 = vld [vmem:[%s3 + $0x4] sm:$0xf]
        %v337 = vld [vmem:[%s3 + $0x8] sm:$0xf]
        %v338 = vld [vmem:[%s3 + $0xc] sm:$0xf]
        %v339 = vld [vmem:[%s4] sm:$0xff]
        %v340 = vld [vmem:[%s4 + $0x8] sm:$0xff]
        %v341 = vld [vmem:[%s4 + $0x10] sm:$0xff]
        %v342 = vld [vmem:[%s4 + $0x18] sm:$0xff]
        %v343 = vld [vmem:[%s5] sm:$0xff]
        %v344 = vld [vmem:[%s5 + $0x8] sm:$0xff]
        %v345 = vld [vmem:[%s5 + $0x10] sm:$0xff]
        %v346 = vld [vmem:[%s5 + $0x18] sm:$0xff]
        %v347 = vlaneseq
        %v348 = vand.u32 %v347, 127
        %v349 = vadd.s32 %v348, 128
        %vm350 = vcmp.ge.s32.totalorder %v348, 2
        %vm351 = vcmp.ge.s32.totalorder %v349, 2
        %v352 = vsel %vm350, 1, 0
        %v353 = vsel %vm351, 1, 0
        %v354 = vcvt.s32.f32 %v352
        %v355 = vcvt.s32.f32 %v353
        %vm356 = vcmp.lt.s32.totalorder %v348, 254
        %vm357 = vcmp.lt.s32.totalorder %v349, 254
        %v358 = vsel %vm356, 1, 0
        %v359 = vsel %vm357, 1, 0
        %v360 = vcvt.s32.f32 %v358
        %v361 = vcvt.s32.f32 %v359
        %v362 = vld [vmem:[%s282] sm:$0xff]
        %v363 = vld [vmem:[%s282 + $0x8] sm:$0xff]
        %v364 = vld [vmem:[%s282 + $0x10] sm:$0xff]
        %v365 = vld [vmem:[%s282 + $0x18] sm:$0xff]
        %v366 = vpack.c.bf16 %v364, %v362
        %v367 = vpack.c.bf16 %v365, %v363
        %369 = vset.pattern.permute.xlu0 0
        %370 = vperm.xlu0 %369, %v343
        %v371 = vpop.permute.xlu0 %370
        %374 = vset.pattern.permute.xlu0 0
        %375 = vperm.xlu0 %374, %v344
        %v376 = vpop.permute.xlu0 %375
        %379 = vset.pattern.permute.xlu0 0
        %380 = vperm.xlu0 %379, %v345
        %v381 = vpop.permute.xlu0 %380
        %384 = vset.pattern.permute.xlu0 0
        %385 = vperm.xlu0 %384, %v346
        %v386 = vpop.permute.xlu0 %385
        %v392 = vunpack.c.l.b16 %v331
        %v393 = vunpack.c.l.b16 %v332
        %v394 = vunpack.c.l.b16 %v333
        %v395 = vunpack.c.l.b16 %v334
        %v396 = vpack.c.b16 %v393, %v392
        %v397 = vpack.c.b16 %v395, %v394
        %vm398 = vcmask 130048
        %v400 = vsel %vm398, %v396, 0
        %v403 = vsel %vm398, %v397, 0
        %405 = vmatpush.bf16.msra.mxu0 0
        %406 = vmatpush.bf16.msra.mxu0 0
        %407 = vmatpush.bf16.msra.mxu0 0
        %408 = vmatpush.bf16.msra.mxu0 0
        %409 = vmatpush.bf16.msra.mxu0 0
        %410 = vmatpush.bf16.msra.mxu0 0
        %411 = vmatpush.bf16.msra.mxu0 0
        %412 = vmatpush.bf16.msra.mxu0 %v366
        %413 = vmatmul.bf16.gmra.mxu0 %v400
        %v414 = vpop.f32.mrf.mxu0
        %v415 = vadd.f32 %v371, %v414
        %v416 = vpop.f32.mrf.mxu0
        %v417 = vadd.f32 %v376, %v416
        %418 = vmatmul.bf16.gmra.mxu0 %v403
        %v419 = vpop.f32.mrf.mxu0
        %v420 = vadd.f32 %v381, %v419
        %v421 = vpop.f32.mrf.mxu0
        %v422 = vadd.f32 %v386, %v421
        %423 = vdwg.mxu0
        %424 = vmatpush.bf16.msra.mxu0 0
        %425 = vmatpush.bf16.msra.mxu0 0
        %426 = vmatpush.bf16.msra.mxu0 0
        %427 = vmatpush.bf16.msra.mxu0 0
        %428 = vmatpush.bf16.msra.mxu0 0
        %429 = vmatpush.bf16.msra.mxu0 0
        %430 = vmatpush.bf16.msra.mxu0 0
        %431 = vmatpush.bf16.msra.mxu0 %v367
        %432 = vmatmul.bf16.gmra.mxu0 %v400
        %v433 = vpop.f32.mrf.mxu0
        %v434 = vadd.f32 %v371, %v433
        %v435 = vpop.f32.mrf.mxu0
        %v436 = vadd.f32 %v376, %v435
        %437 = vmatmul.bf16.gmra.mxu0 %v403
        %v438 = vpop.f32.mrf.mxu0
        %v439 = vadd.f32 %v381, %v438
        %v440 = vpop.f32.mrf.mxu0
        %v441 = vadd.f32 %v386, %v440
        %442 = vdwg.mxu0
        %vm443 = vcmp.ge.f32.partialorder %v415, 0.0
        %vm444 = vcmp.ge.f32.partialorder %v434, 0.0
        %vm445 = vcmp.ge.f32.partialorder %v417, 0.0
        %vm446 = vcmp.ge.f32.partialorder %v436, 0.0
        %vm447 = vcmp.ge.f32.partialorder %v420, 0.0
        %vm448 = vcmp.ge.f32.partialorder %v439, 0.0
        %vm449 = vcmp.ge.f32.partialorder %v422, 0.0
        %vm450 = vcmp.ge.f32.partialorder %v441, 0.0
        %v451 = vstv %s329
        %v452 = vmul.f32 %v451, %v415
        %v453 = vmul.f32 %v451, %v434
        %v454 = vmul.f32 %v451, %v417
        %v455 = vmul.f32 %v451, %v436
        %v456 = vmul.f32 %v451, %v420
        %v457 = vmul.f32 %v451, %v439
        %v458 = vmul.f32 %v451, %v422
        %v459 = vmul.f32 %v451, %v441
        %v460 = vsel %vm443, %v415, %v452
        %v461 = vsel %vm444, %v434, %v453
        %v462 = vsel %vm445, %v417, %v454
        %v463 = vsel %vm446, %v436, %v455
        %v464 = vsel %vm447, %v420, %v456
        %v465 = vsel %vm448, %v439, %v457
        %v466 = vsel %vm449, %v422, %v458
        %v467 = vsel %vm450, %v441, %v459
        %v468 = vmul.f32 %v460, %v460
        %v469 = vmul.f32 %v461, %v461
        %v470 = vmul.f32 %v462, %v462
        %v471 = vmul.f32 %v463, %v463
        %v472 = vmul.f32 %v464, %v464
        %v473 = vmul.f32 %v465, %v465
        %v474 = vmul.f32 %v466, %v466
        %v475 = vmul.f32 %v467, %v467
        %v476 = vadd.f32 %v460, %v461
        %477 = vadd.xlane.f32.xlu0 %v476
        %v478 = vpop.xlane.xlu0 %477
        %v479 = vadd.f32 %v462, %v463
        %480 = vadd.xlane.f32.xlu0 %v479
        %v481 = vpop.xlane.xlu0 %480
        %v482 = vadd.f32 %v464, %v465
        %483 = vadd.xlane.f32.xlu0 %v482
        %v484 = vpop.xlane.xlu0 %483
        %v485 = vadd.f32 %v466, %v467
        %486 = vadd.xlane.f32.xlu0 %v485
        %v487 = vpop.xlane.xlu0 %486
        %v488 = vadd.f32 %v468, %v469
        %489 = vadd.xlane.f32.xlu0 %v488
        %v490 = vpop.xlane.xlu0 %489
        %v491 = vadd.f32 %v470, %v471
        %492 = vadd.xlane.f32.xlu0 %v491
        %v493 = vpop.xlane.xlu0 %492
        %v494 = vadd.f32 %v472, %v473
        %495 = vadd.xlane.f32.xlu0 %v494
        %v496 = vpop.xlane.xlu0 %495
        %v497 = vadd.f32 %v474, %v475
        %498 = vadd.xlane.f32.xlu0 %v497
        %v499 = vpop.xlane.xlu0 %498
        %vm500 = vcmask 7168
        %v501 = vsel %vm500, %v478, 0.0
        %v502 = vsel %vm500, %v481, 0.0
        %v503 = vadd.f32 %v501, %v502
        %v504 = vsel %vm500, %v484, 0.0
        %v505 = vadd.f32 %v503, %v504
        %v506 = vsel %vm500, %v487, 0.0
        %v507 = vadd.f32 %v505, %v506
        %508 = vadd.xlane.f32.xlu0 %v507
        %v509 = vpop.xlane.xlu0 %508
        %v510 = vrot.slane %v509, 4
        %v511 = vadd.f32 %v509, %v510
        %v512 = vrot.slane %v511, 2
        %v513 = vadd.f32 %v511, %v512
        %v514 = vrot.slane %v513, 1
        %v515 = vadd.f32 %v513, %v514
        %s516 = vtos %v515
        %v517 = vsel %vm500, %v490, 0.0
        %v518 = vsel %vm500, %v493, 0.0
        %v519 = vadd.f32 %v517, %v518
        %v520 = vsel %vm500, %v496, 0.0
        %v521 = vadd.f32 %v519, %v520
        %v522 = vsel %vm500, %v499, 0.0
        %v523 = vadd.f32 %v521, %v522
        %524 = vadd.xlane.f32.xlu0 %v523
        %v525 = vpop.xlane.xlu0 %524
        %v526 = vrot.slane %v525, 4
        %v527 = vadd.f32 %v525, %v526
        %v528 = vrot.slane %v527, 2
        %v529 = vadd.f32 %v527, %v528
        %v530 = vrot.slane %v529, 1
        %v531 = vadd.f32 %v529, %v530
        %s532 = vtos %v531
        %s533 = smul.f32 %s516, 0.00012207031
        %s534 = smul.f32 %s532, 0.00012207031
        %s535 = smul.f32 %s533, %s533
        %s536 = ssub.f32 %s534, %s535
        %s537 = smax.f32 %s536, 0.0
        %s538 = sadd.f32 %s537, 1e-08
        %v539 = vstv %s538
        %v540 = vrsqrt.pop %v539
        %v541 = vmul.f32 %v540, %v539
        %v542 = vmul.f32 %v541, %v540
        %v543 = vmul.f32 0.5, %v542
        %v544 = vsub.f32 1.5, %v543
        %v545 = vmul.f32 %v540, %v544
        %vm546 = vweird.f32 %v539
        %vm547 = vweird.f32 %v540
        %vm548 = vmor %vm546, %vm547
        %v549 = vsel %vm548, %v540, %v545
        %s550 = vtos %v549
        %v551 = vstv %s550
        %v552 = vmul.f32 %v343, %v551
        %v553 = vmul.f32 %v344, %v551
        %v554 = vmul.f32 %v345, %v551
        %v555 = vmul.f32 %v346, %v551
        %v556 = vstv %s533
        %v557 = vmul.f32 %v556, %v552
        %v558 = vmul.f32 %v556, %v553
        %v559 = vmul.f32 %v556, %v554
        %v560 = vmul.f32 %v556, %v555
        %565 = vrot.lane.b32.xlu0 %v557, 1
        %v566 = vpop.permute.xlu0 %565
        %567 = vrot.lane.b32.xlu0 %v558, 1
        %v568 = vpop.permute.xlu0 %567
        %569 = vrot.lane.b32.xlu0 %v559, 1
        %v570 = vpop.permute.xlu0 %569
        %571 = vrot.lane.b32.xlu0 %v560, 1
        %v572 = vpop.permute.xlu0 %571
        %v577 = vsub.f32 %v343, %v566
        %v578 = vsub.f32 %v344, %v568
        %v579 = vsub.f32 %v345, %v570
        %v580 = vsub.f32 %v346, %v572
        %582 = vset.pattern.permute.xlu0 1
        %583 = vperm.xlu0 %582, %v552
        %v584 = vpop.permute.xlu0 %583
        %587 = vset.pattern.permute.xlu0 1
        %588 = vperm.xlu0 %587, %v553
        %v589 = vpop.permute.xlu0 %588
        %592 = vset.pattern.permute.xlu0 1
        %593 = vperm.xlu0 %592, %v554
        %v594 = vpop.permute.xlu0 %593
        %597 = vset.pattern.permute.xlu0 1
        %598 = vperm.xlu0 %597, %v555
        %v599 = vpop.permute.xlu0 %598
        %v601 = vmul.f32 %v460, %v584
        %v602 = vmul.f32 %v461, %v584
        %v603 = vmul.f32 %v462, %v589
        %v604 = vmul.f32 %v463, %v589
        %v605 = vmul.f32 %v464, %v594
        %v606 = vmul.f32 %v465, %v594
        %v607 = vmul.f32 %v466, %v599
        %v608 = vmul.f32 %v467, %v599
        %610 = vset.pattern.permute.xlu0 2
        %611 = vperm.xlu0 %610, %v577
        %v612 = vpop.permute.xlu0 %611
        %615 = vset.pattern.permute.xlu0 2
        %616 = vperm.xlu0 %615, %v578
        %v617 = vpop.permute.xlu0 %616
        %620 = vset.pattern.permute.xlu0 2
        %621 = vperm.xlu0 %620, %v579
        %v622 = vpop.permute.xlu0 %621
        %625 = vset.pattern.permute.xlu0 2
        %626 = vperm.xlu0 %625, %v580
        %v627 = vpop.permute.xlu0 %626
        %v629 = vadd.f32 %v601, %v612
        %v630 = vadd.f32 %v602, %v612
        %v631 = vadd.f32 %v603, %v617
        %v632 = vadd.f32 %v604, %v617
        %v633 = vadd.f32 %v605, %v622
        %v634 = vadd.f32 %v606, %v622
        %v635 = vadd.f32 %v607, %v627
        %v636 = vadd.f32 %v608, %v627
        %637 = vrot.lane.b32.xlu0 %v629, 2
        %v638 = vpop.permute.xlu0 %637
        %639 = vrot.lane.b32.xlu0 %v631, 2
        %v640 = vpop.permute.xlu0 %639
        %641 = vrot.lane.b32.xlu0 %v633, 2
        %v642 = vpop.permute.xlu0 %641
        %643 = vrot.lane.b32.xlu0 %v635, 2
        %v644 = vpop.permute.xlu0 %643
        %645 = vrot.lane.b32.xlu0 %v630, 2
        %v646 = vpop.permute.xlu0 %645
        %647 = vrot.lane.b32.xlu0 %v632, 2
        %v648 = vpop.permute.xlu0 %647
        %649 = vrot.lane.b32.xlu0 %v634, 2
        %v650 = vpop.permute.xlu0 %649
        %651 = vrot.lane.b32.xlu0 %v636, 2
        %v652 = vpop.permute.xlu0 %651
        %vm653 = vcmp.lt.s32.totalorder %v348, 2
        %v654 = vsel %vm653, %v638, %v646
        %v655 = vsel %vm653, %v640, %v648
        %v656 = vsel %vm653, %v642, %v650
        %v657 = vsel %vm653, %v644, %v652
        %v658 = vsel %vm653, %v646, %v638
        %v659 = vsel %vm653, %v648, %v640
        %v660 = vsel %vm653, %v650, %v642
        %v661 = vsel %vm653, %v652, %v644
        %v662 = vmul.f32 %v658, %v354
        %v663 = vmul.f32 %v654, %v355
        %v664 = vmul.f32 %v659, %v354
        %v665 = vmul.f32 %v655, %v355
        %v666 = vmul.f32 %v660, %v354
        %v667 = vmul.f32 %v656, %v355
        %v668 = vmul.f32 %v661, %v354
        %v669 = vmul.f32 %v657, %v355
        %670 = vset.pattern.permute.xlu0 6
        %671 = vperm.xlu0 %670, %v343
        %v672 = vpop.permute.xlu0 %671
        %674 = vset.pattern.permute.xlu0 6
        %675 = vperm.xlu0 %674, %v344
        %v676 = vpop.permute.xlu0 %675
        %678 = vset.pattern.permute.xlu0 6
        %679 = vperm.xlu0 %678, %v345
        %v680 = vpop.permute.xlu0 %679
        %682 = vset.pattern.permute.xlu0 6
        %683 = vperm.xlu0 %682, %v346
        %v684 = vpop.permute.xlu0 %683
        %v686 = vmul.f32 %v672, %v662
        %v687 = vmul.f32 %v672, %v663
        %v688 = vmul.f32 %v676, %v664
        %v689 = vmul.f32 %v676, %v665
        %v690 = vmul.f32 %v680, %v666
        %v691 = vmul.f32 %v680, %v667
        %v692 = vmul.f32 %v684, %v668
        %v693 = vmul.f32 %v684, %v669
        %694 = vset.pattern.permute.xlu0 7
        %695 = vperm.xlu0 %694, %v343
        %v696 = vpop.permute.xlu0 %695
        %698 = vset.pattern.permute.xlu0 7
        %699 = vperm.xlu0 %698, %v344
        %v700 = vpop.permute.xlu0 %699
        %702 = vset.pattern.permute.xlu0 7
        %703 = vperm.xlu0 %702, %v345
        %v704 = vpop.permute.xlu0 %703
        %706 = vset.pattern.permute.xlu0 7
        %707 = vperm.xlu0 %706, %v346
        %v708 = vpop.permute.xlu0 %707
        %v710 = vmul.f32 %v696, %v629
        %v711 = vmul.f32 %v696, %v630
        %v712 = vmul.f32 %v700, %v631
        %v713 = vmul.f32 %v700, %v632
        %v714 = vmul.f32 %v704, %v633
        %v715 = vmul.f32 %v704, %v634
        %v716 = vmul.f32 %v708, %v635
        %v717 = vmul.f32 %v708, %v636
        %v718 = vadd.f32 %v686, %v710
        %v719 = vadd.f32 %v687, %v711
        %v720 = vadd.f32 %v688, %v712
        %v721 = vadd.f32 %v689, %v713
        %v722 = vadd.f32 %v690, %v714
        %v723 = vadd.f32 %v691, %v715
        %v724 = vadd.f32 %v692, %v716
        %v725 = vadd.f32 %v693, %v717
        %726 = vrot.lane.b32.xlu0 %v629, 126
        %v727 = vpop.permute.xlu0 %726
        %728 = vrot.lane.b32.xlu0 %v631, 126
        %v729 = vpop.permute.xlu0 %728
        %730 = vrot.lane.b32.xlu0 %v633, 126
        %v731 = vpop.permute.xlu0 %730
        %732 = vrot.lane.b32.xlu0 %v635, 126
        %v733 = vpop.permute.xlu0 %732
        %734 = vrot.lane.b32.xlu0 %v630, 126
        %v735 = vpop.permute.xlu0 %734
        %736 = vrot.lane.b32.xlu0 %v632, 126
        %v737 = vpop.permute.xlu0 %736
        %738 = vrot.lane.b32.xlu0 %v634, 126
        %v739 = vpop.permute.xlu0 %738
        %740 = vrot.lane.b32.xlu0 %v636, 126
        %v741 = vpop.permute.xlu0 %740
        %vm742 = vcmp.lt.s32.totalorder %v348, 126
        %v743 = vsel %vm742, %v727, %v735
        %v744 = vsel %vm742, %v729, %v737
        %v745 = vsel %vm742, %v731, %v739
        %v746 = vsel %vm742, %v733, %v741
        %v747 = vsel %vm742, %v735, %v727
        %v748 = vsel %vm742, %v737, %v729
        %v749 = vsel %vm742, %v739, %v731
        %v750 = vsel %vm742, %v741, %v733
        %v751 = vmul.f32 %v743, %v360
        %v752 = vmul.f32 %v747, %v361
        %v753 = vmul.f32 %v744, %v360
        %v754 = vmul.f32 %v748, %v361
        %v755 = vmul.f32 %v745, %v360
        %v756 = vmul.f32 %v749, %v361
        %v757 = vmul.f32 %v746, %v360
        %v758 = vmul.f32 %v750, %v361
        %759 = vset.pattern.permute.xlu0 8
        %760 = vperm.xlu0 %759, %v343
        %v761 = vpop.permute.xlu0 %760
        %763 = vset.pattern.permute.xlu0 8
        %764 = vperm.xlu0 %763, %v344
        %v765 = vpop.permute.xlu0 %764
        %767 = vset.pattern.permute.xlu0 8
        %768 = vperm.xlu0 %767, %v345
        %v769 = vpop.permute.xlu0 %768
        %771 = vset.pattern.permute.xlu0 8
        %772 = vperm.xlu0 %771, %v346
        %v773 = vpop.permute.xlu0 %772
        %v775 = vmul.f32 %v761, %v751
        %v776 = vmul.f32 %v761, %v752
        %v777 = vmul.f32 %v765, %v753
        %v778 = vmul.f32 %v765, %v754
        %v779 = vmul.f32 %v769, %v755
        %v780 = vmul.f32 %v769, %v756
        %v781 = vmul.f32 %v773, %v757
        %v782 = vmul.f32 %v773, %v758
        %v783 = vadd.f32 %v718, %v775
        %v784 = vadd.f32 %v719, %v776
        %v785 = vadd.f32 %v720, %v777
        %v786 = vadd.f32 %v721, %v778
        %v787 = vadd.f32 %v722, %v779
        %v788 = vadd.f32 %v723, %v780
        %v789 = vadd.f32 %v724, %v781
        %v790 = vadd.f32 %v725, %v782
        %791 = vset.pattern.permute.xlu0 3
        %792 = vperm.xlu0 %791, %v343
        %v793 = vpop.permute.xlu0 %792
        %795 = vset.pattern.permute.xlu0 3
        %796 = vperm.xlu0 %795, %v344
        %v797 = vpop.permute.xlu0 %796
        %799 = vset.pattern.permute.xlu0 3
        %800 = vperm.xlu0 %799, %v345
        %v801 = vpop.permute.xlu0 %800
        %803 = vset.pattern.permute.xlu0 3
        %804 = vperm.xlu0 %803, %v346
        %v805 = vpop.permute.xlu0 %804
        %v807 = vadd.f32 %v783, %v793
        %v808 = vadd.f32 %v784, %v793
        %v809 = vadd.f32 %v785, %v797
        %v810 = vadd.f32 %v786, %v797
        %v811 = vadd.f32 %v787, %v801
        %v812 = vadd.f32 %v788, %v801
        %v813 = vadd.f32 %v789, %v805
        %v814 = vadd.f32 %v790, %v805
        %vm815 = vcmp.ge.f32.partialorder %v807, 0.0
        %vm816 = vcmp.ge.f32.partialorder %v808, 0.0
        %vm817 = vcmp.ge.f32.partialorder %v809, 0.0
        %vm818 = vcmp.ge.f32.partialorder %v810, 0.0
        %vm819 = vcmp.ge.f32.partialorder %v811, 0.0
        %vm820 = vcmp.ge.f32.partialorder %v812, 0.0
        %vm821 = vcmp.ge.f32.partialorder %v813, 0.0
        %vm822 = vcmp.ge.f32.partialorder %v814, 0.0
        %v823 = vstv %s330
        %v824 = vmul.f32 %v823, %v807
        %v825 = vmul.f32 %v823, %v808
        %v826 = vmul.f32 %v823, %v809
        %v827 = vmul.f32 %v823, %v810
        %v828 = vmul.f32 %v823, %v811
        %v829 = vmul.f32 %v823, %v812
        %v830 = vmul.f32 %v823, %v813
        %v831 = vmul.f32 %v823, %v814
        %v832 = vsel %vm815, %v807, %v824
        %v833 = vsel %vm816, %v808, %v825
        %v834 = vsel %vm817, %v809, %v826
        %v835 = vsel %vm818, %v810, %v827
        %v836 = vsel %vm819, %v811, %v828
        %v837 = vsel %vm820, %v812, %v829
        %v838 = vsel %vm821, %v813, %v830
        %v839 = vsel %vm822, %v814, %v831
        %v840 = vmul.f32 %v832, %v832
        %v841 = vmul.f32 %v833, %v833
        %v842 = vmul.f32 %v834, %v834
        %v843 = vmul.f32 %v835, %v835
        %v844 = vmul.f32 %v836, %v836
        %v845 = vmul.f32 %v837, %v837
        %v846 = vmul.f32 %v838, %v838
        %v847 = vmul.f32 %v839, %v839
        %v848 = vadd.f32 %v832, %v833
        %849 = vadd.xlane.f32.xlu0 %v848
        %v850 = vpop.xlane.xlu0 %849
        %v851 = vadd.f32 %v834, %v835
        %852 = vadd.xlane.f32.xlu0 %v851
        %v853 = vpop.xlane.xlu0 %852
        %v854 = vadd.f32 %v836, %v837
        %855 = vadd.xlane.f32.xlu0 %v854
        %v856 = vpop.xlane.xlu0 %855
        %v857 = vadd.f32 %v838, %v839
        %858 = vadd.xlane.f32.xlu0 %v857
        %v859 = vpop.xlane.xlu0 %858
        %v860 = vadd.f32 %v840, %v841
        %861 = vadd.xlane.f32.xlu0 %v860
        %v862 = vpop.xlane.xlu0 %861
        %v863 = vadd.f32 %v842, %v843
        %864 = vadd.xlane.f32.xlu0 %v863
        %v865 = vpop.xlane.xlu0 %864
        %v866 = vadd.f32 %v844, %v845
        %867 = vadd.xlane.f32.xlu0 %v866
        %v868 = vpop.xlane.xlu0 %867
        %v869 = vadd.f32 %v846, %v847
        %870 = vadd.xlane.f32.xlu0 %v869
        %v871 = vpop.xlane.xlu0 %870
        %v872 = vsel %vm500, %v850, 0.0
        %v873 = vsel %vm500, %v853, 0.0
        %v874 = vadd.f32 %v872, %v873
        %v875 = vsel %vm500, %v856, 0.0
        %v876 = vadd.f32 %v874, %v875
        %v877 = vsel %vm500, %v859, 0.0
        %v878 = vadd.f32 %v876, %v877
        %879 = vadd.xlane.f32.xlu0 %v878
        %v880 = vpop.xlane.xlu0 %879
        %v881 = vrot.slane %v880, 4
        %v882 = vadd.f32 %v880, %v881
        %v883 = vrot.slane %v882, 2
        %v884 = vadd.f32 %v882, %v883
        %v885 = vrot.slane %v884, 1
        %v886 = vadd.f32 %v884, %v885
        %s887 = vtos %v886
        %v888 = vsel %vm500, %v862, 0.0
        %v889 = vsel %vm500, %v865, 0.0
        %v890 = vadd.f32 %v888, %v889
        %v891 = vsel %vm500, %v868, 0.0
        %v892 = vadd.f32 %v890, %v891
        %v893 = vsel %vm500, %v871, 0.0
        %v894 = vadd.f32 %v892, %v893
        %895 = vadd.xlane.f32.xlu0 %v894
        %v896 = vpop.xlane.xlu0 %895
        %v897 = vrot.slane %v896, 4
        %v898 = vadd.f32 %v896, %v897
        %v899 = vrot.slane %v898, 2
        %v900 = vadd.f32 %v898, %v899
        %v901 = vrot.slane %v900, 1
        %v902 = vadd.f32 %v900, %v901
        %s903 = vtos %v902
        %s904 = smul.f32 %s887, 0.00012207031
        %s905 = smul.f32 %s903, 0.00012207031
        %s906 = smul.f32 %s904, %s904
        %s907 = ssub.f32 %s905, %s906
        %s908 = smax.f32 %s907, 0.0
        %s909 = sadd.f32 %s908, 1e-08
        %v910 = vstv %s909
        %v911 = vrsqrt.pop %v910
        %v912 = vmul.f32 %v911, %v910
        %v913 = vmul.f32 %v912, %v911
        %v914 = vmul.f32 0.5, %v913
        %v915 = vsub.f32 1.5, %v914
        %v916 = vmul.f32 %v911, %v915
        %vm917 = vweird.f32 %v910
        %vm918 = vweird.f32 %v911
        %vm919 = vmor %vm917, %vm918
        %v920 = vsel %vm919, %v911, %v916
        %s921 = vtos %v920
        %v922 = vstv %s921
        %v923 = vmul.f32 %v343, %v922
        %v924 = vmul.f32 %v344, %v922
        %v925 = vmul.f32 %v345, %v922
        %v926 = vmul.f32 %v346, %v922
        %v927 = vstv %s904
        %v928 = vmul.f32 %v927, %v923
        %v929 = vmul.f32 %v927, %v924
        %v930 = vmul.f32 %v927, %v925
        %v931 = vmul.f32 %v927, %v926
        %936 = vrot.lane.b32.xlu0 %v928, 1
        %v937 = vpop.permute.xlu0 %936
        %938 = vrot.lane.b32.xlu0 %v929, 1
        %v939 = vpop.permute.xlu0 %938
        %940 = vrot.lane.b32.xlu0 %v930, 1
        %v941 = vpop.permute.xlu0 %940
        %942 = vrot.lane.b32.xlu0 %v931, 1
        %v943 = vpop.permute.xlu0 %942
        %v948 = vsub.f32 %v343, %v937
        %v949 = vsub.f32 %v344, %v939
        %v950 = vsub.f32 %v345, %v941
        %v951 = vsub.f32 %v346, %v943
        %953 = vset.pattern.permute.xlu0 4
        %954 = vperm.xlu0 %953, %v923
        %v955 = vpop.permute.xlu0 %954
        %958 = vset.pattern.permute.xlu0 4
        %959 = vperm.xlu0 %958, %v924
        %v960 = vpop.permute.xlu0 %959
        %963 = vset.pattern.permute.xlu0 4
        %964 = vperm.xlu0 %963, %v925
        %v965 = vpop.permute.xlu0 %964
        %968 = vset.pattern.permute.xlu0 4
        %969 = vperm.xlu0 %968, %v926
        %v970 = vpop.permute.xlu0 %969
        %v972 = vmul.f32 %v832, %v955
        %v973 = vmul.f32 %v833, %v955
        %v974 = vmul.f32 %v834, %v960
        %v975 = vmul.f32 %v835, %v960
        %v976 = vmul.f32 %v836, %v965
        %v977 = vmul.f32 %v837, %v965
        %v978 = vmul.f32 %v838, %v970
        %v979 = vmul.f32 %v839, %v970
        %981 = vset.pattern.permute.xlu0 5
        %982 = vperm.xlu0 %981, %v948
        %v983 = vpop.permute.xlu0 %982
        %986 = vset.pattern.permute.xlu0 5
        %987 = vperm.xlu0 %986, %v949
        %v988 = vpop.permute.xlu0 %987
        %991 = vset.pattern.permute.xlu0 5
        %992 = vperm.xlu0 %991, %v950
        %v993 = vpop.permute.xlu0 %992
        %996 = vset.pattern.permute.xlu0 5
        %997 = vperm.xlu0 %996, %v951
        %v998 = vpop.permute.xlu0 %997
        %v1000 = vadd.f32 %v972, %v983
        %v1001 = vadd.f32 %v973, %v983
        %v1002 = vadd.f32 %v974, %v988
        %v1003 = vadd.f32 %v975, %v988
        %v1004 = vadd.f32 %v976, %v993
        %v1005 = vadd.f32 %v977, %v993
        %v1006 = vadd.f32 %v978, %v998
        %v1007 = vadd.f32 %v979, %v998
        %v1008 = vpack.c.bf16 %v1002, %v1000
        %v1009 = vpack.c.bf16 %v1003, %v1001
        %v1010 = vpack.c.bf16 %v1006, %v1004
        %v1011 = vpack.c.bf16 %v1007, %v1005
        %1013 = vset.pattern.permute.xlu0 0
        %1014 = vperm.xlu0 %1013, %v339
        %v1015 = vpop.permute.xlu0 %1014
        %1018 = vset.pattern.permute.xlu0 0
        %1019 = vperm.xlu0 %1018, %v340
        %v1020 = vpop.permute.xlu0 %1019
        %1023 = vset.pattern.permute.xlu0 0
        %1024 = vperm.xlu0 %1023, %v341
        %v1025 = vpop.permute.xlu0 %1024
        %1028 = vset.pattern.permute.xlu0 0
        %1029 = vperm.xlu0 %1028, %v342
        %v1030 = vpop.permute.xlu0 %1029
        %v1036 = vunpack.c.l.b16 %v335
        %v1037 = vunpack.c.l.b16 %v336
        %v1038 = vunpack.c.l.b16 %v337
        %v1039 = vunpack.c.l.b16 %v338
        %v1040 = vpack.c.b16 %v1037, %v1036
        %v1041 = vpack.c.b16 %v1039, %v1038
        %vm1042 = vcmask 261120
        %v1044 = vsel %vm1042, %v1040, 0
        %v1047 = vsel %vm1042, %v1041, 0
        %1049 = vmatpush.bf16.msra.mxu0 0
        %1050 = vmatpush.bf16.msra.mxu0 0
        %1051 = vmatpush.bf16.msra.mxu0 0
        %1052 = vmatpush.bf16.msra.mxu0 0
        %1053 = vmatpush.bf16.msra.mxu0 0
        %1054 = vmatpush.bf16.msra.mxu0 0
        %1055 = vmatpush.bf16.msra.mxu0 %v1010
        %1056 = vmatpush.bf16.msra.mxu0 %v1008
        %1057 = vmatmul.bf16.gmra.mxu0 %v1044
        %v1058 = vpop.f32.mrf.mxu0
        %v1059 = vadd.f32 %v1015, %v1058
        %v1060 = vpop.f32.mrf.mxu0
        %v1061 = vadd.f32 %v1020, %v1060
        %1062 = vmatmul.bf16.gmra.mxu0 %v1047
        %v1063 = vpop.f32.mrf.mxu0
        %v1064 = vadd.f32 %v1025, %v1063
        %v1065 = vpop.f32.mrf.mxu0
        %v1066 = vadd.f32 %v1030, %v1065
        %1067 = vdwg.mxu0
        %1068 = vmatpush.bf16.msra.mxu0 0
        %1069 = vmatpush.bf16.msra.mxu0 0
        %1070 = vmatpush.bf16.msra.mxu0 0
        %1071 = vmatpush.bf16.msra.mxu0 0
        %1072 = vmatpush.bf16.msra.mxu0 0
        %1073 = vmatpush.bf16.msra.mxu0 0
        %1074 = vmatpush.bf16.msra.mxu0 %v1011
        %1075 = vmatpush.bf16.msra.mxu0 %v1009
        %1076 = vmatmul.bf16.gmra.mxu0 %v1044
        %v1077 = vpop.f32.mrf.mxu0
        %v1078 = vadd.f32 %v1015, %v1077
        %v1079 = vpop.f32.mrf.mxu0
        %v1080 = vadd.f32 %v1020, %v1079
        %1081 = vmatmul.bf16.gmra.mxu0 %v1047
        %v1082 = vpop.f32.mrf.mxu0
        %v1083 = vadd.f32 %v1025, %v1082
        %v1084 = vpop.f32.mrf.mxu0
        %v1085 = vadd.f32 %v1030, %v1084
        %1086 = vdwg.mxu0
        %1087 = vst [vmem:[%s317] sm:$0xff] %v1059
        %1088 = vst [vmem:[%s317 + $0x8] sm:$0xff] %v1078
        %1089 = vst [vmem:[%s317 + $0x10] sm:$0xff] %v1061
        %1090 = vst [vmem:[%s317 + $0x18] sm:$0xff] %v1080
        %1091 = vst [vmem:[%s324] sm:$0xff] %v1064
        %1092 = vst [vmem:[%s324 + $0x8] sm:$0xff] %v1083
        %1093 = vst [vmem:[%s324 + $0x10] sm:$0xff] %v1066
        %1094 = vst [vmem:[%s324 + $0x18] sm:$0xff] %v1085
        %s1095 = scalar_lea.vmem %s282, 32 [#allocation2]
        %v1096 = vld [vmem:[%s1095] sm:$0xff]
        %v1097 = vld [vmem:[%s1095 + $0x8] sm:$0xff]
        %v1098 = vld [vmem:[%s1095 + $0x10] sm:$0xff]
        %v1099 = vld [vmem:[%s1095 + $0x18] sm:$0xff]
        %v1100 = vpack.c.bf16 %v1098, %v1096
        %v1101 = vpack.c.bf16 %v1099, %v1097
        %1102 = vmatpush.bf16.msra.mxu0 0
        %1103 = vmatpush.bf16.msra.mxu0 0
        %1104 = vmatpush.bf16.msra.mxu0 0
        %1105 = vmatpush.bf16.msra.mxu0 0
        %1106 = vmatpush.bf16.msra.mxu0 0
        %1107 = vmatpush.bf16.msra.mxu0 0
        %1108 = vmatpush.bf16.msra.mxu0 0
        %1109 = vmatpush.bf16.msra.mxu0 %v1100
        %1110 = vmatmul.bf16.gmra.mxu0 %v400
        %v1111 = vpop.f32.mrf.mxu0
        %v1112 = vadd.f32 %v371, %v1111
        %v1113 = vpop.f32.mrf.mxu0
        %v1114 = vadd.f32 %v376, %v1113
        %1115 = vmatmul.bf16.gmra.mxu0 %v403
        %v1116 = vpop.f32.mrf.mxu0
        %v1117 = vadd.f32 %v381, %v1116
        %v1118 = vpop.f32.mrf.mxu0
        %v1119 = vadd.f32 %v386, %v1118
        %1120 = vdwg.mxu0
        %1121 = vmatpush.bf16.msra.mxu0 0
        %1122 = vmatpush.bf16.msra.mxu0 0
        %1123 = vmatpush.bf16.msra.mxu0 0
        %1124 = vmatpush.bf16.msra.mxu0 0
        %1125 = vmatpush.bf16.msra.mxu0 0
        %1126 = vmatpush.bf16.msra.mxu0 0
        %1127 = vmatpush.bf16.msra.mxu0 0
        %1128 = vmatpush.bf16.msra.mxu0 %v1101
        %1129 = vmatmul.bf16.gmra.mxu0 %v400
        %v1130 = vpop.f32.mrf.mxu0
        %v1131 = vadd.f32 %v371, %v1130
        %v1132 = vpop.f32.mrf.mxu0
        %v1133 = vadd.f32 %v376, %v1132
        %1134 = vmatmul.bf16.gmra.mxu0 %v403
        %v1135 = vpop.f32.mrf.mxu0
        %v1136 = vadd.f32 %v381, %v1135
        %v1137 = vpop.f32.mrf.mxu0
        %v1138 = vadd.f32 %v386, %v1137
        %1139 = vdwg.mxu0
        %vm1140 = vcmp.ge.f32.partialorder %v1112, 0.0
        %vm1141 = vcmp.ge.f32.partialorder %v1131, 0.0
        %vm1142 = vcmp.ge.f32.partialorder %v1114, 0.0
        %vm1143 = vcmp.ge.f32.partialorder %v1133, 0.0
        %vm1144 = vcmp.ge.f32.partialorder %v1117, 0.0
        %vm1145 = vcmp.ge.f32.partialorder %v1136, 0.0
        %vm1146 = vcmp.ge.f32.partialorder %v1119, 0.0
        %vm1147 = vcmp.ge.f32.partialorder %v1138, 0.0
        %v1148 = vmul.f32 %v451, %v1112
        %v1149 = vmul.f32 %v451, %v1131
        %v1150 = vmul.f32 %v451, %v1114
        %v1151 = vmul.f32 %v451, %v1133
        %v1152 = vmul.f32 %v451, %v1117
        %v1153 = vmul.f32 %v451, %v1136
        %v1154 = vmul.f32 %v451, %v1119
        %v1155 = vmul.f32 %v451, %v1138
        %v1156 = vsel %vm1140, %v1112, %v1148
        %v1157 = vsel %vm1141, %v1131, %v1149
        %v1158 = vsel %vm1142, %v1114, %v1150
        %v1159 = vsel %vm1143, %v1133, %v1151
        %v1160 = vsel %vm1144, %v1117, %v1152
        %v1161 = vsel %vm1145, %v1136, %v1153
        %v1162 = vsel %vm1146, %v1119, %v1154
        %v1163 = vsel %vm1147, %v1138, %v1155
        %v1164 = vmul.f32 %v1156, %v1156
        %v1165 = vmul.f32 %v1157, %v1157
        %v1166 = vmul.f32 %v1158, %v1158
        %v1167 = vmul.f32 %v1159, %v1159
        %v1168 = vmul.f32 %v1160, %v1160
        %v1169 = vmul.f32 %v1161, %v1161
        %v1170 = vmul.f32 %v1162, %v1162
        %v1171 = vmul.f32 %v1163, %v1163
        %v1172 = vadd.f32 %v1156, %v1157
        %1173 = vadd.xlane.f32.xlu0 %v1172
        %v1174 = vpop.xlane.xlu0 %1173
        %v1175 = vadd.f32 %v1158, %v1159
        %1176 = vadd.xlane.f32.xlu0 %v1175
        %v1177 = vpop.xlane.xlu0 %1176
        %v1178 = vadd.f32 %v1160, %v1161
        %1179 = vadd.xlane.f32.xlu0 %v1178
        %v1180 = vpop.xlane.xlu0 %1179
        %v1181 = vadd.f32 %v1162, %v1163
        %1182 = vadd.xlane.f32.xlu0 %v1181
        %v1183 = vpop.xlane.xlu0 %1182
        %v1184 = vadd.f32 %v1164, %v1165
        %1185 = vadd.xlane.f32.xlu0 %v1184
        %v1186 = vpop.xlane.xlu0 %1185
        %v1187 = vadd.f32 %v1166, %v1167
        %1188 = vadd.xlane.f32.xlu0 %v1187
        %v1189 = vpop.xlane.xlu0 %1188
        %v1190 = vadd.f32 %v1168, %v1169
        %1191 = vadd.xlane.f32.xlu0 %v1190
        %v1192 = vpop.xlane.xlu0 %1191
        %v1193 = vadd.f32 %v1170, %v1171
        %1194 = vadd.xlane.f32.xlu0 %v1193
        %v1195 = vpop.xlane.xlu0 %1194
        %v1196 = vsel %vm500, %v1174, 0.0
        %v1197 = vsel %vm500, %v1177, 0.0
        %v1198 = vadd.f32 %v1196, %v1197
        %v1199 = vsel %vm500, %v1180, 0.0
        %v1200 = vadd.f32 %v1198, %v1199
        %v1201 = vsel %vm500, %v1183, 0.0
        %v1202 = vadd.f32 %v1200, %v1201
        %1203 = vadd.xlane.f32.xlu0 %v1202
        %v1204 = vpop.xlane.xlu0 %1203
        %v1205 = vrot.slane %v1204, 4
        %v1206 = vadd.f32 %v1204, %v1205
        %v1207 = vrot.slane %v1206, 2
        %v1208 = vadd.f32 %v1206, %v1207
        %v1209 = vrot.slane %v1208, 1
        %v1210 = vadd.f32 %v1208, %v1209
        %s1211 = vtos %v1210
        %v1212 = vsel %vm500, %v1186, 0.0
        %v1213 = vsel %vm500, %v1189, 0.0
        %v1214 = vadd.f32 %v1212, %v1213
        %v1215 = vsel %vm500, %v1192, 0.0
        %v1216 = vadd.f32 %v1214, %v1215
        %v1217 = vsel %vm500, %v1195, 0.0
        %v1218 = vadd.f32 %v1216, %v1217
        %1219 = vadd.xlane.f32.xlu0 %v1218
        %v1220 = vpop.xlane.xlu0 %1219
        %v1221 = vrot.slane %v1220, 4
        %v1222 = vadd.f32 %v1220, %v1221
        %v1223 = vrot.slane %v1222, 2
        %v1224 = vadd.f32 %v1222, %v1223
        %v1225 = vrot.slane %v1224, 1
        %v1226 = vadd.f32 %v1224, %v1225
        %s1227 = vtos %v1226
        %s1228 = smul.f32 %s1211, 0.00012207031
        %s1229 = smul.f32 %s1227, 0.00012207031
        %s1230 = smul.f32 %s1228, %s1228
        %s1231 = ssub.f32 %s1229, %s1230
        %s1232 = smax.f32 %s1231, 0.0
        %s1233 = sadd.f32 %s1232, 1e-08
        %v1234 = vstv %s1233
        %v1235 = vrsqrt.pop %v1234
        %v1236 = vmul.f32 %v1235, %v1234
        %v1237 = vmul.f32 %v1236, %v1235
        %v1238 = vmul.f32 0.5, %v1237
        %v1239 = vsub.f32 1.5, %v1238
        %v1240 = vmul.f32 %v1235, %v1239
        %vm1241 = vweird.f32 %v1234
        %vm1242 = vweird.f32 %v1235
        %vm1243 = vmor %vm1241, %vm1242
        %v1244 = vsel %vm1243, %v1235, %v1240
        %s1245 = vtos %v1244
        %v1246 = vstv %s1245
        %v1247 = vmul.f32 %v343, %v1246
        %v1248 = vmul.f32 %v344, %v1246
        %v1249 = vmul.f32 %v345, %v1246
        %v1250 = vmul.f32 %v346, %v1246
        %v1251 = vstv %s1228
        %v1252 = vmul.f32 %v1251, %v1247
        %v1253 = vmul.f32 %v1251, %v1248
        %v1254 = vmul.f32 %v1251, %v1249
        %v1255 = vmul.f32 %v1251, %v1250
        %1260 = vrot.lane.b32.xlu0 %v1252, 1
        %v1261 = vpop.permute.xlu0 %1260
        %1262 = vrot.lane.b32.xlu0 %v1253, 1
        %v1263 = vpop.permute.xlu0 %1262
        %1264 = vrot.lane.b32.xlu0 %v1254, 1
        %v1265 = vpop.permute.xlu0 %1264
        %1266 = vrot.lane.b32.xlu0 %v1255, 1
        %v1267 = vpop.permute.xlu0 %1266
        %v1272 = vsub.f32 %v343, %v1261
        %v1273 = vsub.f32 %v344, %v1263
        %v1274 = vsub.f32 %v345, %v1265
        %v1275 = vsub.f32 %v346, %v1267
        %1277 = vset.pattern.permute.xlu0 1
        %1278 = vperm.xlu0 %1277, %v1247
        %v1279 = vpop.permute.xlu0 %1278
        %1282 = vset.pattern.permute.xlu0 1
        %1283 = vperm.xlu0 %1282, %v1248
        %v1284 = vpop.permute.xlu0 %1283
        %1287 = vset.pattern.permute.xlu0 1
        %1288 = vperm.xlu0 %1287, %v1249
        %v1289 = vpop.permute.xlu0 %1288
        %1292 = vset.pattern.permute.xlu0 1
        %1293 = vperm.xlu0 %1292, %v1250
        %v1294 = vpop.permute.xlu0 %1293
        %v1296 = vmul.f32 %v1156, %v1279
        %v1297 = vmul.f32 %v1157, %v1279
        %v1298 = vmul.f32 %v1158, %v1284
        %v1299 = vmul.f32 %v1159, %v1284
        %v1300 = vmul.f32 %v1160, %v1289
        %v1301 = vmul.f32 %v1161, %v1289
        %v1302 = vmul.f32 %v1162, %v1294
        %v1303 = vmul.f32 %v1163, %v1294
        %1305 = vset.pattern.permute.xlu0 2
        %1306 = vperm.xlu0 %1305, %v1272
        %v1307 = vpop.permute.xlu0 %1306
        %1310 = vset.pattern.permute.xlu0 2
        %1311 = vperm.xlu0 %1310, %v1273
        %v1312 = vpop.permute.xlu0 %1311
        %1315 = vset.pattern.permute.xlu0 2
        %1316 = vperm.xlu0 %1315, %v1274
        %v1317 = vpop.permute.xlu0 %1316
        %1320 = vset.pattern.permute.xlu0 2
        %1321 = vperm.xlu0 %1320, %v1275
        %v1322 = vpop.permute.xlu0 %1321
        %v1324 = vadd.f32 %v1296, %v1307
        %v1325 = vadd.f32 %v1297, %v1307
        %v1326 = vadd.f32 %v1298, %v1312
        %v1327 = vadd.f32 %v1299, %v1312
        %v1328 = vadd.f32 %v1300, %v1317
        %v1329 = vadd.f32 %v1301, %v1317
        %v1330 = vadd.f32 %v1302, %v1322
        %v1331 = vadd.f32 %v1303, %v1322
        %1332 = vrot.lane.b32.xlu0 %v1324, 2
        %v1333 = vpop.permute.xlu0 %1332
        %1334 = vrot.lane.b32.xlu0 %v1326, 2
        %v1335 = vpop.permute.xlu0 %1334
        %1336 = vrot.lane.b32.xlu0 %v1328, 2
        %v1337 = vpop.permute.xlu0 %1336
        %1338 = vrot.lane.b32.xlu0 %v1330, 2
        %v1339 = vpop.permute.xlu0 %1338
        %1340 = vrot.lane.b32.xlu0 %v1325, 2
        %v1341 = vpop.permute.xlu0 %1340
        %1342 = vrot.lane.b32.xlu0 %v1327, 2
        %v1343 = vpop.permute.xlu0 %1342
        %1344 = vrot.lane.b32.xlu0 %v1329, 2
        %v1345 = vpop.permute.xlu0 %1344
        %1346 = vrot.lane.b32.xlu0 %v1331, 2
        %v1347 = vpop.permute.xlu0 %1346
        %v1348 = vsel %vm653, %v1333, %v1341
        %v1349 = vsel %vm653, %v1335, %v1343
        %v1350 = vsel %vm653, %v1337, %v1345
        %v1351 = vsel %vm653, %v1339, %v1347
        %v1352 = vsel %vm653, %v1341, %v1333
        %v1353 = vsel %vm653, %v1343, %v1335
        %v1354 = vsel %vm653, %v1345, %v1337
        %v1355 = vsel %vm653, %v1347, %v1339
        %v1356 = vmul.f32 %v1352, %v354
        %v1357 = vmul.f32 %v1348, %v355
        %v1358 = vmul.f32 %v1353, %v354
        %v1359 = vmul.f32 %v1349, %v355
        %v1360 = vmul.f32 %v1354, %v354
        %v1361 = vmul.f32 %v1350, %v355
        %v1362 = vmul.f32 %v1355, %v354
        %v1363 = vmul.f32 %v1351, %v355
        %v1364 = vmul.f32 %v672, %v1356
        %v1365 = vmul.f32 %v672, %v1357
        %v1366 = vmul.f32 %v676, %v1358
        %v1367 = vmul.f32 %v676, %v1359
        %v1368 = vmul.f32 %v680, %v1360
        %v1369 = vmul.f32 %v680, %v1361
        %v1370 = vmul.f32 %v684, %v1362
        %v1371 = vmul.f32 %v684, %v1363
        %v1372 = vmul.f32 %v696, %v1324
        %v1373 = vmul.f32 %v696, %v1325
        %v1374 = vmul.f32 %v700, %v1326
        %v1375 = vmul.f32 %v700, %v1327
        %v1376 = vmul.f32 %v704, %v1328
        %v1377 = vmul.f32 %v704, %v1329
        %v1378 = vmul.f32 %v708, %v1330
        %v1379 = vmul.f32 %v708, %v1331
        %v1380 = vadd.f32 %v1364, %v1372
        %v1381 = vadd.f32 %v1365, %v1373
        %v1382 = vadd.f32 %v1366, %v1374
        %v1383 = vadd.f32 %v1367, %v1375
        %v1384 = vadd.f32 %v1368, %v1376
        %v1385 = vadd.f32 %v1369, %v1377
        %v1386 = vadd.f32 %v1370, %v1378
        %v1387 = vadd.f32 %v1371, %v1379
        %1388 = vrot.lane.b32.xlu0 %v1324, 126
        %v1389 = vpop.permute.xlu0 %1388
        %1390 = vrot.lane.b32.xlu0 %v1326, 126
        %v1391 = vpop.permute.xlu0 %1390
        %1392 = vrot.lane.b32.xlu0 %v1328, 126
        %v1393 = vpop.permute.xlu0 %1392
        %1394 = vrot.lane.b32.xlu0 %v1330, 126
        %v1395 = vpop.permute.xlu0 %1394
        %1396 = vrot.lane.b32.xlu0 %v1325, 126
        %v1397 = vpop.permute.xlu0 %1396
        %1398 = vrot.lane.b32.xlu0 %v1327, 126
        %v1399 = vpop.permute.xlu0 %1398
        %1400 = vrot.lane.b32.xlu0 %v1329, 126
        %v1401 = vpop.permute.xlu0 %1400
        %1402 = vrot.lane.b32.xlu0 %v1331, 126
        %v1403 = vpop.permute.xlu0 %1402
        %v1404 = vsel %vm742, %v1389, %v1397
        %v1405 = vsel %vm742, %v1391, %v1399
        %v1406 = vsel %vm742, %v1393, %v1401
        %v1407 = vsel %vm742, %v1395, %v1403
        %v1408 = vsel %vm742, %v1397, %v1389
        %v1409 = vsel %vm742, %v1399, %v1391
        %v1410 = vsel %vm742, %v1401, %v1393
        %v1411 = vsel %vm742, %v1403, %v1395
        %v1412 = vmul.f32 %v1404, %v360
        %v1413 = vmul.f32 %v1408, %v361
        %v1414 = vmul.f32 %v1405, %v360
        %v1415 = vmul.f32 %v1409, %v361
        %v1416 = vmul.f32 %v1406, %v360
        %v1417 = vmul.f32 %v1410, %v361
        %v1418 = vmul.f32 %v1407, %v360
        %v1419 = vmul.f32 %v1411, %v361
        %v1420 = vmul.f32 %v761, %v1412
        %v1421 = vmul.f32 %v761, %v1413
        %v1422 = vmul.f32 %v765, %v1414
        %v1423 = vmul.f32 %v765, %v1415
        %v1424 = vmul.f32 %v769, %v1416
        %v1425 = vmul.f32 %v769, %v1417
        %v1426 = vmul.f32 %v773, %v1418
        %v1427 = vmul.f32 %v773, %v1419
        %v1428 = vadd.f32 %v1380, %v1420
        %v1429 = vadd.f32 %v1381, %v1421
        %v1430 = vadd.f32 %v1382, %v1422
        %v1431 = vadd.f32 %v1383, %v1423
        %v1432 = vadd.f32 %v1384, %v1424
        %v1433 = vadd.f32 %v1385, %v1425
        %v1434 = vadd.f32 %v1386, %v1426
        %v1435 = vadd.f32 %v1387, %v1427
        %v1436 = vadd.f32 %v1428, %v793
        %v1437 = vadd.f32 %v1429, %v793
        %v1438 = vadd.f32 %v1430, %v797
        %v1439 = vadd.f32 %v1431, %v797
        %v1440 = vadd.f32 %v1432, %v801
        %v1441 = vadd.f32 %v1433, %v801
        %v1442 = vadd.f32 %v1434, %v805
        %v1443 = vadd.f32 %v1435, %v805
        %vm1444 = vcmp.ge.f32.partialorder %v1436, 0.0
        %vm1445 = vcmp.ge.f32.partialorder %v1437, 0.0
        %vm1446 = vcmp.ge.f32.partialorder %v1438, 0.0
        %vm1447 = vcmp.ge.f32.partialorder %v1439, 0.0
        %vm1448 = vcmp.ge.f32.partialorder %v1440, 0.0
        %vm1449 = vcmp.ge.f32.partialorder %v1441, 0.0
        %vm1450 = vcmp.ge.f32.partialorder %v1442, 0.0
        %vm1451 = vcmp.ge.f32.partialorder %v1443, 0.0
        %v1452 = vmul.f32 %v823, %v1436
        %v1453 = vmul.f32 %v823, %v1437
        %v1454 = vmul.f32 %v823, %v1438
        %v1455 = vmul.f32 %v823, %v1439
        %v1456 = vmul.f32 %v823, %v1440
        %v1457 = vmul.f32 %v823, %v1441
        %v1458 = vmul.f32 %v823, %v1442
        %v1459 = vmul.f32 %v823, %v1443
        %v1460 = vsel %vm1444, %v1436, %v1452
        %v1461 = vsel %vm1445, %v1437, %v1453
        %v1462 = vsel %vm1446, %v1438, %v1454
        %v1463 = vsel %vm1447, %v1439, %v1455
        %v1464 = vsel %vm1448, %v1440, %v1456
        %v1465 = vsel %vm1449, %v1441, %v1457
        %v1466 = vsel %vm1450, %v1442, %v1458
        %v1467 = vsel %vm1451, %v1443, %v1459
        %v1468 = vmul.f32 %v1460, %v1460
        %v1469 = vmul.f32 %v1461, %v1461
        %v1470 = vmul.f32 %v1462, %v1462
        %v1471 = vmul.f32 %v1463, %v1463
        %v1472 = vmul.f32 %v1464, %v1464
        %v1473 = vmul.f32 %v1465, %v1465
        %v1474 = vmul.f32 %v1466, %v1466
        %v1475 = vmul.f32 %v1467, %v1467
        %v1476 = vadd.f32 %v1460, %v1461
        %1477 = vadd.xlane.f32.xlu0 %v1476
        %v1478 = vpop.xlane.xlu0 %1477
        %v1479 = vadd.f32 %v1462, %v1463
        %1480 = vadd.xlane.f32.xlu0 %v1479
        %v1481 = vpop.xlane.xlu0 %1480
        %v1482 = vadd.f32 %v1464, %v1465
        %1483 = vadd.xlane.f32.xlu0 %v1482
        %v1484 = vpop.xlane.xlu0 %1483
        %v1485 = vadd.f32 %v1466, %v1467
        %1486 = vadd.xlane.f32.xlu0 %v1485
        %v1487 = vpop.xlane.xlu0 %1486
        %v1488 = vadd.f32 %v1468, %v1469
        %1489 = vadd.xlane.f32.xlu0 %v1488
        %v1490 = vpop.xlane.xlu0 %1489
        %v1491 = vadd.f32 %v1470, %v1471
        %1492 = vadd.xlane.f32.xlu0 %v1491
        %v1493 = vpop.xlane.xlu0 %1492
        %v1494 = vadd.f32 %v1472, %v1473
        %1495 = vadd.xlane.f32.xlu0 %v1494
        %v1496 = vpop.xlane.xlu0 %1495
        %v1497 = vadd.f32 %v1474, %v1475
        %1498 = vadd.xlane.f32.xlu0 %v1497
        %v1499 = vpop.xlane.xlu0 %1498
        %v1500 = vsel %vm500, %v1478, 0.0
        %v1501 = vsel %vm500, %v1481, 0.0
        %v1502 = vadd.f32 %v1500, %v1501
        %v1503 = vsel %vm500, %v1484, 0.0
        %v1504 = vadd.f32 %v1502, %v1503
        %v1505 = vsel %vm500, %v1487, 0.0
        %v1506 = vadd.f32 %v1504, %v1505
        %1507 = vadd.xlane.f32.xlu0 %v1506
        %v1508 = vpop.xlane.xlu0 %1507
        %v1509 = vrot.slane %v1508, 4
        %v1510 = vadd.f32 %v1508, %v1509
        %v1511 = vrot.slane %v1510, 2
        %v1512 = vadd.f32 %v1510, %v1511
        %v1513 = vrot.slane %v1512, 1
        %v1514 = vadd.f32 %v1512, %v1513
        %s1515 = vtos %v1514
        %v1516 = vsel %vm500, %v1490, 0.0
        %v1517 = vsel %vm500, %v1493, 0.0
        %v1518 = vadd.f32 %v1516, %v1517
        %v1519 = vsel %vm500, %v1496, 0.0
        %v1520 = vadd.f32 %v1518, %v1519
        %v1521 = vsel %vm500, %v1499, 0.0
        %v1522 = vadd.f32 %v1520, %v1521
        %1523 = vadd.xlane.f32.xlu0 %v1522
        %v1524 = vpop.xlane.xlu0 %1523
        %v1525 = vrot.slane %v1524, 4
        %v1526 = vadd.f32 %v1524, %v1525
        %v1527 = vrot.slane %v1526, 2
        %v1528 = vadd.f32 %v1526, %v1527
        %v1529 = vrot.slane %v1528, 1
        %v1530 = vadd.f32 %v1528, %v1529
        %s1531 = vtos %v1530
        %s1532 = smul.f32 %s1515, 0.00012207031
        %s1533 = smul.f32 %s1531, 0.00012207031
        %s1534 = smul.f32 %s1532, %s1532
        %s1535 = ssub.f32 %s1533, %s1534
        %s1536 = smax.f32 %s1535, 0.0
        %s1537 = sadd.f32 %s1536, 1e-08
        %v1538 = vstv %s1537
        %v1539 = vrsqrt.pop %v1538
        %v1540 = vmul.f32 %v1539, %v1538
        %v1541 = vmul.f32 %v1540, %v1539
        %v1542 = vmul.f32 0.5, %v1541
        %v1543 = vsub.f32 1.5, %v1542
        %v1544 = vmul.f32 %v1539, %v1543
        %vm1545 = vweird.f32 %v1538
        %vm1546 = vweird.f32 %v1539
        %vm1547 = vmor %vm1545, %vm1546
        %v1548 = vsel %vm1547, %v1539, %v1544
        %s1549 = vtos %v1548
        %v1550 = vstv %s1549
        %v1551 = vmul.f32 %v343, %v1550
        %v1552 = vmul.f32 %v344, %v1550
        %v1553 = vmul.f32 %v345, %v1550
        %v1554 = vmul.f32 %v346, %v1550
        %v1555 = vstv %s1532
        %v1556 = vmul.f32 %v1555, %v1551
        %v1557 = vmul.f32 %v1555, %v1552
        %v1558 = vmul.f32 %v1555, %v1553
        %v1559 = vmul.f32 %v1555, %v1554
        %1564 = vrot.lane.b32.xlu0 %v1556, 1
        %v1565 = vpop.permute.xlu0 %1564
        %1566 = vrot.lane.b32.xlu0 %v1557, 1
        %v1567 = vpop.permute.xlu0 %1566
        %1568 = vrot.lane.b32.xlu0 %v1558, 1
        %v1569 = vpop.permute.xlu0 %1568
        %1570 = vrot.lane.b32.xlu0 %v1559, 1
        %v1571 = vpop.permute.xlu0 %1570
        %v1576 = vsub.f32 %v343, %v1565
        %v1577 = vsub.f32 %v344, %v1567
        %v1578 = vsub.f32 %v345, %v1569
        %v1579 = vsub.f32 %v346, %v1571
        %1581 = vset.pattern.permute.xlu0 4
        %1582 = vperm.xlu0 %1581, %v1551
        %v1583 = vpop.permute.xlu0 %1582
        %1586 = vset.pattern.permute.xlu0 4
        %1587 = vperm.xlu0 %1586, %v1552
        %v1588 = vpop.permute.xlu0 %1587
        %1591 = vset.pattern.permute.xlu0 4
        %1592 = vperm.xlu0 %1591, %v1553
        %v1593 = vpop.permute.xlu0 %1592
        %1596 = vset.pattern.permute.xlu0 4
        %1597 = vperm.xlu0 %1596, %v1554
        %v1598 = vpop.permute.xlu0 %1597
        %v1600 = vmul.f32 %v1460, %v1583
        %v1601 = vmul.f32 %v1461, %v1583
        %v1602 = vmul.f32 %v1462, %v1588
        %v1603 = vmul.f32 %v1463, %v1588
        %v1604 = vmul.f32 %v1464, %v1593
        %v1605 = vmul.f32 %v1465, %v1593
        %v1606 = vmul.f32 %v1466, %v1598
        %v1607 = vmul.f32 %v1467, %v1598
        %1609 = vset.pattern.permute.xlu0 5
        %1610 = vperm.xlu0 %1609, %v1576
        %v1611 = vpop.permute.xlu0 %1610
        %1614 = vset.pattern.permute.xlu0 5
        %1615 = vperm.xlu0 %1614, %v1577
        %v1616 = vpop.permute.xlu0 %1615
        %1619 = vset.pattern.permute.xlu0 5
        %1620 = vperm.xlu0 %1619, %v1578
        %v1621 = vpop.permute.xlu0 %1620
        %1624 = vset.pattern.permute.xlu0 5
        %1625 = vperm.xlu0 %1624, %v1579
        %v1626 = vpop.permute.xlu0 %1625
        %v1628 = vadd.f32 %v1600, %v1611
        %v1629 = vadd.f32 %v1601, %v1611
        %v1630 = vadd.f32 %v1602, %v1616
        %v1631 = vadd.f32 %v1603, %v1616
        %v1632 = vadd.f32 %v1604, %v1621
        %v1633 = vadd.f32 %v1605, %v1621
        %v1634 = vadd.f32 %v1606, %v1626
        %v1635 = vadd.f32 %v1607, %v1626
        %v1636 = vpack.c.bf16 %v1630, %v1628
        %v1637 = vpack.c.bf16 %v1631, %v1629
        %v1638 = vpack.c.bf16 %v1634, %v1632
        %v1639 = vpack.c.bf16 %v1635, %v1633
        %1640 = vmatpush.bf16.msra.mxu0 0
        %1641 = vmatpush.bf16.msra.mxu0 0
        %1642 = vmatpush.bf16.msra.mxu0 0
        %1643 = vmatpush.bf16.msra.mxu0 0
        %1644 = vmatpush.bf16.msra.mxu0 0
        %1645 = vmatpush.bf16.msra.mxu0 0
        %1646 = vmatpush.bf16.msra.mxu0 %v1638
        %1647 = vmatpush.bf16.msra.mxu0 %v1636
        %1648 = vmatmul.bf16.gmra.mxu0 %v1044
        %v1649 = vpop.f32.mrf.mxu0
        %v1650 = vadd.f32 %v1015, %v1649
        %v1651 = vpop.f32.mrf.mxu0
        %v1652 = vadd.f32 %v1020, %v1651
        %1653 = vmatmul.bf16.gmra.mxu0 %v1047
        %v1654 = vpop.f32.mrf.mxu0
        %v1655 = vadd.f32 %v1025, %v1654
        %v1656 = vpop.f32.mrf.mxu0
        %v1657 = vadd.f32 %v1030, %v1656
        %1658 = vdwg.mxu0
        %1659 = vmatpush.bf16.msra.mxu0 0
        %1660 = vmatpush.bf16.msra.mxu0 0
        %1661 = vmatpush.bf16.msra.mxu0 0
        %1662 = vmatpush.bf16.msra.mxu0 0
        %1663 = vmatpush.bf16.msra.mxu0 0
        %1664 = vmatpush.bf16.msra.mxu0 0
        %1665 = vmatpush.bf16.msra.mxu0 %v1639
        %1666 = vmatpush.bf16.msra.mxu0 %v1637
        %1667 = vmatmul.bf16.gmra.mxu0 %v1044
        %v1668 = vpop.f32.mrf.mxu0
        %v1669 = vadd.f32 %v1015, %v1668
        %v1670 = vpop.f32.mrf.mxu0
        %v1671 = vadd.f32 %v1020, %v1670
        %1672 = vmatmul.bf16.gmra.mxu0 %v1047
        %v1673 = vpop.f32.mrf.mxu0
        %v1674 = vadd.f32 %v1025, %v1673
        %v1675 = vpop.f32.mrf.mxu0
        %v1676 = vadd.f32 %v1030, %v1675
        %1677 = vdwg.mxu0
        %s1678 = scalar_lea.vmem %s317, 32 [#allocation7]
        %1679 = vst [vmem:[%s1678] sm:$0xff] %v1650
        %1680 = vst [vmem:[%s1678 + $0x8] sm:$0xff] %v1669
        %1681 = vst [vmem:[%s1678 + $0x10] sm:$0xff] %v1652
        %1682 = vst [vmem:[%s1678 + $0x18] sm:$0xff] %v1671
        %s1683 = scalar_lea.vmem %s324, 32 [#allocation8]
        %1684 = vst [vmem:[%s1683] sm:$0xff] %v1655
        %1685 = vst [vmem:[%s1683 + $0x8] sm:$0xff] %v1674
        %1686 = vst [vmem:[%s1683 + $0x10] sm:$0xff] %v1657
        %1687 = vst [vmem:[%s1683 + $0x18] sm:$0xff] %v1676
        %s1688 = sand.u32 %s168, 1
        %s1689 = scalar_lea.sflag [#allocation4], %s1688
        %s1690 = sand.u32 %s168, 1
        %s1691 = smul.addr %s1690, 64
        %s1692 = scalar_lea.vmem [#allocation7], %s1691
        %s1693 = sand.u32 %s194, 1
        %s1694 = scalar_lea.sflag [#allocation9], %s1693
        %s1695 = sand.u32 %s194, 1
        %s1696 = smul.addr %s1695, 64
        %s1697 = scalar_lea.vmem [#allocation8], %s1696
        // Predicated region
        $region53: #{tpu_custom_call.1} parent=43 // pred_check
          %p1698 = pneg %p178
        $region54: #{tpu_custom_call.1} parent=43 // pred_check_branch
          %1700 = sbr.rel (%p1698) target = $region56
        $region55: #{tpu_custom_call.1} parent=43 // pred_region
          %s1701 = smul.u32 2, %s29
          %1703 = vsyncadd %s1689, 0
          %s1704 = smul.addr %s1701, 4
          %s1705 = smul.addr %s1704, 8
          %s1706 = scalar_lea.hbm %s6, %s1705
          %s1707 = sshll.u32 %s1692, 4
          %s1708 = int_to_ptr.vmem [resolvable:$true] %s1707
          %s1709 = sshll.u32 %s1706, 4
          %s1710 = int_to_ptr.hbm [resolvable:$true] %s1709
          %1715 = dma.vmem_to_hbm [thread:$0]  %s1708, 1024, %s1710, %s1689, 256, 256, 16
        $region56: #{tpu_custom_call.1} parent=43 // pred_fallthru
          _
        // Predicated region
        $region57: #{tpu_custom_call.1} parent=43 // pred_check
          %p1716 = pneg %p204
        $region58: #{tpu_custom_call.1} parent=43 // pred_check_branch
          %1718 = sbr.rel (%p1716) target = $region60
        $region59: #{tpu_custom_call.1} parent=43 // pred_region
          %s1719 = smul.u32 2, %s29
          %1721 = vsyncadd %s1694, 0
          %s1722 = smul.addr %s1719, 4
          %s1723 = smul.addr %s1722, 8
          %s1724 = scalar_lea.hbm %s7, %s1723
          %s1725 = sshll.u32 %s1697, 4
          %s1726 = int_to_ptr.vmem [resolvable:$true] %s1725
          %s1727 = sshll.u32 %s1724, 4
          %s1728 = int_to_ptr.hbm [resolvable:$true] %s1727
          %1733 = dma.vmem_to_hbm [thread:$0]  %s1726, 1024, %s1728, %s1694, 256, 256, 16
        $region60: #{tpu_custom_call.1} parent=43 // pred_fallthru
          _
      $region44: #{tpu_custom_call.1} parent=5 // pred_fallthru
        _
      %p1734 = scmp.le.s32.totalorder 2, %s24
      // Predicated region
      $region61: #{tpu_custom_call.1} parent=5 // pred_check
        %p1735 = pneg %p1734
      $region62: #{tpu_custom_call.1} parent=5 // pred_check_branch
        %1737 = sbr.rel (%p1735) target = $region64
      $region63: #{tpu_custom_call.1} parent=5 // pred_region
        %s1738 = ssub.s32 %s24, 2
        // Predicated region
        $region65: #{tpu_custom_call.1} parent=63 // pred_check
          %p1739 = pneg %p184
        $region66: #{tpu_custom_call.1} parent=63 // pred_check_branch
          %1741 = sbr.rel (%p1739) target = $region68
        $region67: #{tpu_custom_call.1} parent=63 // pred_region
          %s1742 = sand.u32 %s169, 1
          %s1743 = scalar_lea.sflag [#allocation4], %s1742
          %s1744 = sand.u32 %s169, 1
          %s1745 = smul.addr %s1744, 64
          %s1746 = scalar_lea.vmem [#allocation7], %s1745
          %1748 = dma.done %s1743, 1024
        $region68: #{tpu_custom_call.1} parent=63 // pred_fallthru
          _
        // Predicated region
        $region69: #{tpu_custom_call.1} parent=63 // pred_check
          %p1749 = pneg %p210
        $region70: #{tpu_custom_call.1} parent=63 // pred_check_branch
          %1751 = sbr.rel (%p1749) target = $region72
        $region71: #{tpu_custom_call.1} parent=63 // pred_region
          %s1752 = sand.u32 %s195, 1
          %s1753 = scalar_lea.sflag [#allocation9], %s1752
          %s1754 = sand.u32 %s195, 1
          %s1755 = smul.addr %s1754, 64
          %s1756 = scalar_lea.vmem [#allocation8], %s1755
          %1758 = dma.done %s1753, 1024
        $region72: #{tpu_custom_call.1} parent=63 // pred_fallthru
          _
      $region64: #{tpu_custom_call.1} parent=5 // pred_fallthru
        _
    $region6: #{tpu_custom_call.1} parent=1 // loop_footer
      %s28 = sadd.s32 1, %s24
    $region7: #{tpu_custom_call.1} parent=1 // loop_footer_branch
      %23 = sbr.rel target = $region3
    $region8: #{tpu_custom_call.1} parent=1 // loop_exit
      _
    %1759 = vsyncpa [#allocation3], 1
    %s1760 = scalar_lea.sflag [#allocation3], 1
    %1761 = vsyncpa %s1760, 1
    %1762 = vsyncpa [#allocation4], 1
    %s1763 = scalar_lea.sflag [#allocation4], 1
    %1764 = vsyncpa %s1763, 1
    %1765 = vsyncpa [#allocation9], 1
    %s1766 = scalar_lea.sflag [#allocation9], 1
    %1767 = vsyncpa %s1766, 1
    %1768 = vsyncpa [#allocation5], 1
    %s1769 = scalar_lea.sflag [#allocation5], 1
    %1770 = vsyncpa %s1769, 1

</llo_original>
